<compile_context>
chip_gen: v6e
topology: v6e:2x2x1
jax: 0.10.0
libtpu: 0.0.40
codegen_flags: <defaults>
</compile_context>

<pallas_src>
import math

import jax
import jax.numpy as jnp
from jax import lax
from jax.experimental import pallas as pl
from jax.experimental.pallas import tpu as pltpu

# ---------------- configuration (small shapes implied by the module) ---------
N_FFT = 32
HOP = 16
WIN_LENGTH = 32
FREQ = N_FFT // 2 + 1            # 17 one-sided bins
B = 2                            # batch
L = 256                          # waveform length
T = 1 + L // HOP                 # 17 frames (torch.stft center=True)
C = 2                            # separated sources ("com" channels)
D = 4                            # embedding dimension
H = 32                           # chimera hidden width
MISI_ITERS = 1                   # MISI phase-refinement iterations

PAD = N_FFT // 2                 # 16 (center padding)
PAD_LEN = (T - 1) * HOP + N_FFT  # 288
FD = FREQ * D                    # 68  (embedding head width)
CF = C * FREQ                    # 34  (mask / phase head width)
SEG = 128                        # lane-aligned segment width
NSEG = 4                         # emb | mag | phase_re | phase_im (head packing)
TF = T * FREQ                    # 289 spectrum lanes (logical)
TFP = 384                        # 289 padded up to a multiple of 128
LOG10_SCALE = 10.0 / math.log(10.0)
POW_FLOOR = 1.2e-38              # smallest *normal* f32 region (1e-40 is denormal
                                 # and would flush to 0 on TPU -> log(0) = -inf)


def _full(shape):
    """BlockSpec covering the whole array (grid has a single step)."""
    return pl.BlockSpec(shape, lambda i, s=shape: (0,) * len(s))


# ============================================================================
# Kernel 1: STFT + log-power + chimera (packed heads) + complex-mask apply
#   rows = B*T frames on sublanes, all widths live in 128-lane segments
# ============================================================================
def _front_kernel(frames_ref, dftw_ref, w0_ref, b0_ref, wh_ref, bh_ref,
                  gmat_ref, out_ref):
    # mixture STFT, pre-windowed + C-tiled basis: one MXU op -> [xre2 | xim2]
    spec = jnp.dot(frames_ref[...], dftw_ref[...],
                   preferred_element_type=jnp.float32)            # (R, 2*SEG)
    xre2 = spec[:, :SEG]                                          # lanes [0:CF] valid
    xim2 = spec[:, SEG:]

    # log-power feature 10*log10(|X|^2) on a full 128-lane segment;
    # w0 rows beyond FREQ are zero so the padded lanes contribute nothing.
    p = jnp.maximum(xre2 * xre2 + xim2 * xim2, POW_FLOOR)
    feat = LOG10_SCALE * jnp.log(p)                               # (R, SEG)

    # chimera trunk + all four heads in ONE lane-dense MXU op (H, 4*128)
    h = jnp.tanh(jnp.dot(feat, w0_ref[...],
                         preferred_element_type=jnp.float32) + b0_ref[...])
    head = jnp.dot(h, wh_ref[...], preferred_element_type=jnp.float32) + bh_ref[...]

    emb_raw = jnp.tanh(head[:, 0 * SEG:1 * SEG])                  # [0:FD] valid
    mag = jax.nn.sigmoid(head[:, 1 * SEG:2 * SEG])                # [0:CF] valid
    pr = head[:, 2 * SEG:3 * SEG]
    pi = head[:, 3 * SEG:4 * SEG]
    inv = lax.rsqrt(pr * pr + pi * pi + 1e-8)
    cre = mag * pr * inv
    cim = mag * pi * inv

    # unit-normalize embedding over D (grouped-lane sum via constant matmul)
    ss = jnp.dot(emb_raw * emb_raw, gmat_ref[...],
                 preferred_element_type=jnp.float32)
    emb = emb_raw * lax.rsqrt(ss + 1e-8)

    # complex mask applied to the (already C-tiled) mixture spectrum
    sre = cre * xre2 - cim * xim2
    sim = cre * xim2 + cim * xre2

    # one lane-dense slab, one unmasked store
    out_ref[...] = jnp.concatenate([emb, cre, cim, sre, sim], axis=-1)


def fused_front(frames, dftw, params, gmat):
    R = frames.shape[0]                                           # B*T
    return pl.pallas_call(
        _front_kernel,
        out_shape=jax.ShapeDtypeStruct((R, 5 * SEG), jnp.float32),
        grid_spec=pltpu.PrefetchScalarGridSpec(
            num_scalar_prefetch=0,
            grid=(1,),
            in_specs=[_full((R, N_FFT)), _full((N_FFT, 2 * SEG)),
                      _full((SEG, H)), _full((1, H)),
                      _full((H, NSEG * SEG)), _full((1, NSEG * SEG)),
                      _full((SEG, SEG))],
            out_specs=_full((R, 5 * SEG))),
        compiler_params=pltpu.CompilerParams(
            dimension_semantics=("arbitrary",)),
    )(frames, dftw, params['w0'], params['b0'],
      params['whead'], params['bhead'], gmat)


# ============================================================================
# Kernel 2: MISI — everything resident in VMEM, STFT/ISTFT as fused matrices
#   rows = B*C sources, lanes = [re | im] spectrum padded to 2*TFP = 768
# ============================================================================
def _misi_kernel(s_ref, xc_ref, aa_ref, bb_ref, p_ref, shat_ref):
    sp = s_ref[...]                                               # (B*C, 2*TFP)
    sre = sp[:, :TFP]
    sim = sp[:, TFP:]
    mag = jnp.sqrt(sre * sre + sim * sim)                         # fixed magnitudes

    def istft(s_cat):                                             # fused re/im ISTFT
        return jnp.dot(s_cat, bb_ref[...], preferred_element_type=jnp.float32)

    def consistency(w):                                           # P@w + Mbc@x (hoisted)
        return jnp.dot(p_ref[...], w,
                       preferred_element_type=jnp.float32) + xc_ref[...]

    s_cat = sp
    # TODO(synk): if MISI_ITERS is ever raised, switch to lax.fori_loop(unroll=True).
    for _ in range(MISI_ITERS):
        w = consistency(istft(s_cat))
        ri = jnp.dot(w, aa_ref[...], preferred_element_type=jnp.float32)  # [re2|im2]
        re2 = ri[:, :TFP]
        im2 = ri[:, TFP:]
        inv = lax.rsqrt(re2 * re2 + im2 * im2 + 1e-12)
        s_cat = jnp.concatenate([mag * re2 * inv, mag * im2 * inv], axis=-1)

    shat_ref[...] = consistency(istft(s_cat))


def misi(s_packed, xc, ops):
    BC = s_packed.shape[0]                                        # B*C
    return pl.pallas_call(
        _misi_kernel,
        out_shape=jax.ShapeDtypeStruct((BC, L), jnp.float32),
        grid_spec=pltpu.PrefetchScalarGridSpec(
            num_scalar_prefetch=0,
            grid=(1,),
            in_specs=[_full((BC, 2 * TFP)), _full((BC, L)),
                      _full((L, 2 * TFP)), _full((2 * TFP, L)),
                      _full((BC, BC))],
            out_specs=_full((BC, L))),
        compiler_params=pltpu.CompilerParams(
            dimension_semantics=("arbitrary",)),
    )(s_packed, xc, ops['AA'], ops['BB'], ops['P'])


# ============================================================================
# Constant operators (built once, host/XLA side)
# ============================================================================
def make_operators():
    n = jnp.arange(N_FFT, dtype=jnp.float32)
    f = jnp.arange(FREQ, dtype=jnp.float32)
    window = 0.5 * (1.0 - jnp.cos(2.0 * jnp.pi * n / N_FFT))      # periodic Hann
    ang = 2.0 * jnp.pi * n[:, None] * f[None, :] / N_FFT
    cosm = jnp.cos(ang)                                           # (N_FFT, FREQ)
    sinm = jnp.sin(ang)

    # packed, pre-windowed DFT basis (N_FFT, 2*SEG):
    #   seg0 = [cos | cos] (tiled over C), seg1 = [-sin | -sin], zero elsewhere
    dftw = jnp.zeros((N_FFT, 2 * SEG), jnp.float32)
    dftw = dftw.at[:, 0:FREQ].set(cosm)
    dftw = dftw.at[:, FREQ:CF].set(cosm)
    dftw = dftw.at[:, SEG:SEG + FREQ].set(-sinm)
    dftw = dftw.at[:, SEG + FREQ:SEG + CF].set(-sinm)
    dftw = window[:, None] * dftw

    # ---- STFT as a matrix (reflect pad + frame + window + DFT): (L, TF)
    m = jnp.arange(PAD_LEN)
    refl = jnp.where(m < PAD, PAD - m,
                     jnp.where(m < PAD + L, m - PAD, 2 * (L - 1) + PAD - m))
    Rm = (refl[None, :] == jnp.arange(L)[:, None]).astype(jnp.float32)   # (L, PAD_LEN)
    t_idx = jnp.arange(T)
    n_rel = m[:, None] - t_idx[None, :] * HOP                            # (PAD_LEN, T)
    valid = (n_rel >= 0) & (n_rel < N_FFT)
    n_c = jnp.clip(n_rel, 0, N_FFT - 1)
    win_tf = jnp.where(valid, window[n_c], 0.0)                          # (PAD_LEN, T)
    ang_tf = 2.0 * jnp.pi * n_c[:, :, None] * f[None, None, :] / N_FFT
    Fre = (win_tf[:, :, None] * jnp.cos(ang_tf)).reshape(PAD_LEN, TF)
    Fim = (-win_tf[:, :, None] * jnp.sin(ang_tf)).reshape(PAD_LEN, TF)
    Are = Rm @ Fre                                                       # (L, TF)
    Aim = Rm @ Fim
    # fused + lane-padded to TFP: AA = [Are | Aim]  -> (L, 2*TFP)
    AA = jnp.zeros((L, 2 * TFP), jnp.float32)
    AA = AA.at[:, 0:TF].set(Are).at[:, TFP:TFP + TF].set(Aim)

    # ---- ISTFT as a matrix (iDFT + window + OLA + wsq norm + crop): (TF, L)
    fi = jnp.arange(FREQ)
    coef = jnp.where((fi == 0) | (fi == N_FFT // 2), 1.0, 2.0).astype(jnp.float32)
    m_out = jnp.arange(L) + PAD                                          # (L,)
    n_rel2 = m_out[None, :] - t_idx[:, None] * HOP                       # (T, L)
    valid2 = (n_rel2 >= 0) & (n_rel2 < N_FFT)
    n_c2 = jnp.clip(n_rel2, 0, N_FFT - 1)
    win2 = jnp.where(valid2, window[n_c2], 0.0)                          # (T, L)
    ang2 = 2.0 * jnp.pi * f[None, :, None] * n_c2[:, None, :] / N_FFT    # (T, FREQ, L)
    wsq = jnp.sum(jnp.where(valid2, window[n_c2] ** 2, 0.0), axis=0)     # (L,)
    norm = 1.0 / jnp.maximum(wsq, 1e-11)
    Bre = (win2[:, None, :] * coef[None, :, None] * jnp.cos(ang2) / N_FFT
           * norm[None, None, :]).reshape(TF, L)
    Bim = (-win2[:, None, :] * coef[None, :, None] * jnp.sin(ang2) / N_FFT
           * norm[None, None, :]).reshape(TF, L)
    # fused + row-padded: BB = [Bre ; Bim] -> (2*TFP, L)
    BB = jnp.zeros((2 * TFP, L), jnp.float32)
    BB = BB.at[0:TF].set(Bre).at[TFP:TFP + TF].set(Bim)

    # ---- hoisted mixture-consistency projection: P = I - Mbc @ Msum  (B*C, B*C)
    bi = jnp.arange(B)
    ri = jnp.arange(B * C)
    Msum = (ri[None, :] // C == bi[:, None]).astype(jnp.float32)         # (B, B*C)
    Mbc = (ri[:, None] // C == bi[None, :]).astype(jnp.float32) / C      # (B*C, B)
    Pmat = jnp.eye(B * C, dtype=jnp.float32) - Mbc @ Msum

    # ---- embedding group-sum matrix (sum of squares over D per TF bin), 128-padded
    gi = jnp.arange(SEG)
    Gmat = ((gi[:, None] // D == gi[None, :] // D)
            & (gi[:, None] < FD) & (gi[None, :] < FD)).astype(jnp.float32)

    return dict(dftw=dftw, AA=AA, BB=BB, P=Pmat, Gmat=Gmat)


def frame_mixture(x):
    # reflect pad + reshape-based framing (HOP == N_FFT/2 -> no gather needed)
    xp = jnp.pad(x, ((0, 0), (PAD, PAD)), mode='reflect')                # (B, PAD_LEN)
    halves = xp.reshape(x.shape[0], PAD_LEN // HOP, HOP)                 # (B, T+1, HOP)
    frames = jnp.concatenate([halves[:, :T], halves[:, 1:T + 1]], axis=-1)
    return frames.reshape(x.shape[0] * T, N_FFT)                         # (B*T, N_FFT)


# ============================================================================
# Full forward: Stft -> chimera -> MISI   (two pallas_call launches total)
# ============================================================================
def forward(params, ops, x):
    b = x.shape[0]

    frames = frame_mixture(x)
    slab = fused_front(frames, ops['dftw'], params, ops['Gmat'])         # (B*T, 5*SEG)

    emb_rows = slab[:, 0 * SEG:0 * SEG + FD]
    cre_rows = slab[:, 1 * SEG:1 * SEG + CF]
    cim_rows = slab[:, 2 * SEG:2 * SEG + CF]
    sre_rows = slab[:, 3 * SEG:3 * SEG + CF]
    sim_rows = slab[:, 4 * SEG:4 * SEG + CF]

    # external layouts, formed exactly once
    embd = (emb_rows.reshape(b, T, FREQ, D)
            .transpose(0, 2, 1, 3).reshape(b, FREQ * T, D))
    com_re = cre_rows.reshape(b, T, C, FREQ).transpose(0, 2, 3, 1)       # (B,C,FREQ,T)
    com_im = cim_rows.reshape(b, T, C, FREQ).transpose(0, 2, 3, 1)
    com = jnp.stack([com_re, com_im], axis=-1)                           # (B,C,FREQ,T,2)

    # masked mixture spectra -> (B*C, 2*TFP) packed [re | im] for the MISI kernel
    def to_misi(rows):
        s = (rows.reshape(b, T, C, FREQ)
             .transpose(0, 2, 1, 3).reshape(b * C, TF))
        return jnp.pad(s, ((0, 0), (0, TFP - TF)))
    s_packed = jnp.concatenate([to_misi(sre_rows), to_misi(sim_rows)], axis=-1)

    xc = jnp.repeat(x, C, axis=0) * (1.0 / C)                            # == Mbc @ x
    shat = misi(s_packed, xc, ops).reshape(b, C, L)

    # TODO(synk): reference chimera is a BLSTM with mag/phasebook codebooks and
    # returns an RNN state as out_status; trunk is approximated by a dense layer
    # and out_status is None.
    out_status = None
    return embd, com, shat, out_status


def init_params(key):
    ks = jax.random.split(key, 5)

    def w(k, shape):
        return 0.1 * jax.random.normal(k, shape, jnp.float32)

    # trunk weight zero-padded to a full 128-lane K dim
    w0 = jnp.zeros((SEG, H), jnp.float32).at[:FREQ, :].set(w(ks[0], (FREQ, H)))
    # pack the four heads at 128-lane-aligned offsets -> single lane-dense matmul
    whead = jnp.zeros((H, NSEG * SEG), jnp.float32)
    whead = whead.at[:, 0 * SEG:0 * SEG + FD].set(w(ks[1], (H, FD)))
    whead = whead.at[:, 1 * SEG:1 * SEG + CF].set(w(ks[2], (H, CF)))
    whead = whead.at[:, 2 * SEG:2 * SEG + CF].set(w(ks[3], (H, CF)))
    whead = whead.at[:, 3 * SEG:3 * SEG + CF].set(w(ks[4], (H, CF)))
    return {'w0': w0, 'b0': jnp.zeros((1, H), jnp.float32),
            'whead': whead, 'bhead': jnp.zeros((1, NSEG * SEG), jnp.float32)}


if __name__ == "__main__":
    key = jax.random.PRNGKey(0)
    kx, kp = jax.random.split(key)
    x = jax.random.normal(kx, (B, L), jnp.float32)
    params = init_params(kp)
    ops = make_operators()

    fwd = jax.jit(forward)
    embd, com, shat, out_status = fwd(params, ops, x)
    jax.block_until_ready((embd, com, shat))

    assert embd.shape == (B, FREQ * T, D)
    assert com.shape == (B, C, FREQ, T, 2)
    assert shat.shape == (B, C, L)
    print("KERNEL_OK")
</pallas_src>

<mosaic_0001>
module attributes {stable_mosaic.version = 11 : i64} {
  func.func @_front_kernel(%arg0: i32, %arg1: memref<34x32xf32, #tpu.memory_space<vmem>>, %arg2: memref<32x256xf32, #tpu.memory_space<vmem>>, %arg3: memref<128x32xf32, #tpu.memory_space<vmem>>, %arg4: memref<1x32xf32, #tpu.memory_space<vmem>>, %arg5: memref<32x512xf32, #tpu.memory_space<vmem>>, %arg6: memref<1x512xf32, #tpu.memory_space<vmem>>, %arg7: memref<128x128xf32, #tpu.memory_space<vmem>>, %arg8: memref<34x640xf32, #tpu.memory_space<vmem>>) attributes {dimension_semantics = [#tpu.dimension_semantics<arbitrary>], iteration_bounds = array<i64: 1>, scalar_prefetch = 0 : i64, scratch_operands = 0 : i64, tpu.core_type = #tpu.core_type<tc>, window_params = [{pipeline_mode = #tpu.pipeline_mode<synchronous>, transform_indices = @transform_0, window_bounds = array<i64: 34, 32>}, {pipeline_mode = #tpu.pipeline_mode<synchronous>, transform_indices = @transform_1, window_bounds = array<i64: 32, 256>}, {pipeline_mode = #tpu.pipeline_mode<synchronous>, transform_indices = @transform_2, window_bounds = array<i64: 128, 32>}, {pipeline_mode = #tpu.pipeline_mode<synchronous>, transform_indices = @transform_3, window_bounds = array<i64: 1, 32>}, {pipeline_mode = #tpu.pipeline_mode<synchronous>, transform_indices = @transform_4, window_bounds = array<i64: 32, 512>}, {pipeline_mode = #tpu.pipeline_mode<synchronous>, transform_indices = @transform_5, window_bounds = array<i64: 1, 512>}, {pipeline_mode = #tpu.pipeline_mode<synchronous>, transform_indices = @transform_6, window_bounds = array<i64: 128, 128>}, {pipeline_mode = #tpu.pipeline_mode<synchronous>, transform_indices = @transform_7, window_bounds = array<i64: 34, 640>}]} {
    %c0 = arith.constant 0 : index
    %c0_0 = arith.constant 0 : index
    %0 = vector.load %arg1[%c0, %c0_0] : memref<34x32xf32, #tpu.memory_space<vmem>>, vector<34x32xf32>
    %c0_1 = arith.constant 0 : index
    %c0_2 = arith.constant 0 : index
    %1 = vector.load %arg2[%c0_1, %c0_2] : memref<32x256xf32, #tpu.memory_space<vmem>>, vector<32x256xf32>
    %cst = arith.constant dense<0.000000e+00> : vector<34x256xf32>
    %2 = tpu.matmul %0, %1, %cst {dimension_numbers = #tpu.dot_dimension_numbers<[1], [0], [0], [1], [0, 0, 1, 1], [], []>} : vector<34x32xf32>, vector<32x256xf32>, vector<34x256xf32> -> vector<34x256xf32>
    %3 = vector.extract_strided_slice %2 {offsets = [0, 0], sizes = [34, 128], strides = [1, 1]} : vector<34x256xf32> to vector<34x128xf32>
    %4 = vector.extract_strided_slice %2 {offsets = [0, 128], sizes = [34, 128], strides = [1, 1]} : vector<34x256xf32> to vector<34x128xf32>
    %5 = arith.mulf %3, %3 : vector<34x128xf32>
    %6 = arith.mulf %4, %4 : vector<34x128xf32>
    %7 = arith.addf %5, %6 : vector<34x128xf32>
    %cst_3 = arith.constant 1.200000e-38 : f32
    %8 = vector.broadcast %cst_3 : f32 to vector<34x128xf32>
    %9 = arith.maximumf %7, %8 : vector<34x128xf32>
    %10 = math.log %9 : vector<34x128xf32>
    %cst_4 = arith.constant 4.34294462 : f32
    %11 = vector.broadcast %cst_4 : f32 to vector<34x128xf32>
    %12 = arith.mulf %11, %10 : vector<34x128xf32>
    %c0_5 = arith.constant 0 : index
    %c0_6 = arith.constant 0 : index
    %13 = vector.load %arg3[%c0_5, %c0_6] : memref<128x32xf32, #tpu.memory_space<vmem>>, vector<128x32xf32>
    %cst_7 = arith.constant dense<0.000000e+00> : vector<34x32xf32>
    %14 = tpu.matmul %12, %13, %cst_7 {dimension_numbers = #tpu.dot_dimension_numbers<[1], [0], [0], [1], [0, 0, 1, 1], [], []>} : vector<34x128xf32>, vector<128x32xf32>, vector<34x32xf32> -> vector<34x32xf32>
    %c0_8 = arith.constant 0 : index
    %c0_9 = arith.constant 0 : index
    %15 = vector.load %arg4[%c0_8, %c0_9] : memref<1x32xf32, #tpu.memory_space<vmem>>, vector<1x32xf32>
    %16 = vector.broadcast %15 : vector<1x32xf32> to vector<34x32xf32>
    %17 = arith.addf %14, %16 : vector<34x32xf32>
    %18 = math.tanh %17 : vector<34x32xf32>
    %c0_10 = arith.constant 0 : index
    %c0_11 = arith.constant 0 : index
    %19 = vector.load %arg5[%c0_10, %c0_11] : memref<32x512xf32, #tpu.memory_space<vmem>>, vector<32x512xf32>
    %cst_12 = arith.constant dense<0.000000e+00> : vector<34x512xf32>
    %20 = tpu.matmul %18, %19, %cst_12 {dimension_numbers = #tpu.dot_dimension_numbers<[1], [0], [0], [1], [0, 0, 1, 1], [], []>} : vector<34x32xf32>, vector<32x512xf32>, vector<34x512xf32> -> vector<34x512xf32>
    %c0_13 = arith.constant 0 : index
    %c0_14 = arith.constant 0 : index
    %21 = vector.load %arg6[%c0_13, %c0_14] : memref<1x512xf32, #tpu.memory_space<vmem>>, vector<1x512xf32>
    %22 = vector.broadcast %21 : vector<1x512xf32> to vector<34x512xf32>
    %23 = arith.addf %20, %22 : vector<34x512xf32>
    %24 = vector.extract_strided_slice %23 {offsets = [0, 0], sizes = [34, 128], strides = [1, 1]} : vector<34x512xf32> to vector<34x128xf32>
    %25 = math.tanh %24 : vector<34x128xf32>
    %26 = vector.extract_strided_slice %23 {offsets = [0, 128], sizes = [34, 128], strides = [1, 1]} : vector<34x512xf32> to vector<34x128xf32>
    %27 = arith.negf %26 : vector<34x128xf32>
    %28 = math.exp %27 : vector<34x128xf32>
    %cst_15 = arith.constant 1.000000e+00 : f32
    %29 = vector.broadcast %cst_15 : f32 to vector<34x128xf32>
    %30 = arith.addf %29, %28 : vector<34x128xf32>
    %31 = arith.divf %29, %30 : vector<34x128xf32>
    %32 = vector.extract_strided_slice %23 {offsets = [0, 256], sizes = [34, 128], strides = [1, 1]} : vector<34x512xf32> to vector<34x128xf32>
    %33 = vector.extract_strided_slice %23 {offsets = [0, 384], sizes = [34, 128], strides = [1, 1]} : vector<34x512xf32> to vector<34x128xf32>
    %34 = arith.mulf %32, %32 : vector<34x128xf32>
    %35 = arith.mulf %33, %33 : vector<34x128xf32>
    %36 = arith.addf %34, %35 : vector<34x128xf32>
    %cst_16 = arith.constant 9.99999993E-9 : f32
    %37 = vector.broadcast %cst_16 : f32 to vector<34x128xf32>
    %38 = arith.addf %36, %37 : vector<34x128xf32>
    %39 = math.rsqrt %38 : vector<34x128xf32>
    %40 = arith.mulf %31, %32 : vector<34x128xf32>
    %41 = arith.mulf %40, %39 : vector<34x128xf32>
    %42 = arith.mulf %31, %33 : vector<34x128xf32>
    %43 = arith.mulf %42, %39 : vector<34x128xf32>
    %44 = arith.mulf %25, %25 : vector<34x128xf32>
    %c0_17 = arith.constant 0 : index
    %c0_18 = arith.constant 0 : index
    %45 = vector.load %arg7[%c0_17, %c0_18] : memref<128x128xf32, #tpu.memory_space<vmem>>, vector<128x128xf32>
    %cst_19 = arith.constant dense<0.000000e+00> : vector<34x128xf32>
    %46 = tpu.matmul %44, %45, %cst_19 {dimension_numbers = #tpu.dot_dimension_numbers<[1], [0], [0], [1], [0, 0, 1, 1], [], []>} : vector<34x128xf32>, vector<128x128xf32>, vector<34x128xf32> -> vector<34x128xf32>
    %cst_20 = arith.constant 9.99999993E-9 : f32
    %47 = vector.broadcast %cst_20 : f32 to vector<34x128xf32>
    %48 = arith.addf %46, %47 : vector<34x128xf32>
    %49 = math.rsqrt %48 : vector<34x128xf32>
    %50 = arith.mulf %25, %49 : vector<34x128xf32>
    %51 = arith.mulf %41, %3 : vector<34x128xf32>
    %52 = arith.mulf %43, %4 : vector<34x128xf32>
    %53 = arith.subf %51, %52 : vector<34x128xf32>
    %54 = arith.mulf %41, %4 : vector<34x128xf32>
    %55 = arith.mulf %43, %3 : vector<34x128xf32>
    %56 = arith.addf %54, %55 : vector<34x128xf32>
    %57 = tpu.concatenate %50, %41, %43, %53, %56 in 1 : vector<34x128xf32>, vector<34x128xf32>, vector<34x128xf32>, vector<34x128xf32>, vector<34x128xf32> -> vector<34x640xf32>
    %c0_21 = arith.constant 0 : index
    %c0_22 = arith.constant 0 : index
    %58 = vector.load %arg8[%c0_21, %c0_22] : memref<34x640xf32, #tpu.memory_space<vmem>>, vector<34x640xf32>
    tpu.vector_store %arg8[%c0_21, %c0_22], %57 {strides = array<i32>} : memref<34x640xf32, #tpu.memory_space<vmem>>, vector<34x640xf32>,
    return
  }
  func.func @transform_0(%arg0: i32) -> (i32, i32) {
    %c0_i32 = arith.constant 0 : i32
    %c0_i32_0 = arith.constant 0 : i32
    %c0_i32_1 = arith.constant 0 : i32
    return %c0_i32, %c0_i32_0 : i32, i32
  }
  func.func @transform_1(%arg0: i32) -> (i32, i32) {
    %c0_i32 = arith.constant 0 : i32
    %c0_i32_0 = arith.constant 0 : i32
    %c0_i32_1 = arith.constant 0 : i32
    return %c0_i32, %c0_i32_0 : i32, i32
  }
  func.func @transform_2(%arg0: i32) -> (i32, i32) {
    %c0_i32 = arith.constant 0 : i32
    %c0_i32_0 = arith.constant 0 : i32
    %c0_i32_1 = arith.constant 0 : i32
    return %c0_i32, %c0_i32_0 : i32, i32
  }
  func.func @transform_3(%arg0: i32) -> (i32, i32) {
    %c0_i32 = arith.constant 0 : i32
    %c0_i32_0 = arith.constant 0 : i32
    %c0_i32_1 = arith.constant 0 : i32
    return %c0_i32, %c0_i32_0 : i32, i32
  }
  func.func @transform_4(%arg0: i32) -> (i32, i32) {
    %c0_i32 = arith.constant 0 : i32
    %c0_i32_0 = arith.constant 0 : i32
    %c0_i32_1 = arith.constant 0 : i32
    return %c0_i32, %c0_i32_0 : i32, i32
  }
  func.func @transform_5(%arg0: i32) -> (i32, i32) {
    %c0_i32 = arith.constant 0 : i32
    %c0_i32_0 = arith.constant 0 : i32
    %c0_i32_1 = arith.constant 0 : i32
    return %c0_i32, %c0_i32_0 : i32, i32
  }
  func.func @transform_6(%arg0: i32) -> (i32, i32) {
    %c0_i32 = arith.constant 0 : i32
    %c0_i32_0 = arith.constant 0 : i32
    %c0_i32_1 = arith.constant 0 : i32
    return %c0_i32, %c0_i32_0 : i32, i32
  }
  func.func @transform_7(%arg0: i32) -> (i32, i32) {
    %c0_i32 = arith.constant 0 : i32
    %c0_i32_0 = arith.constant 0 : i32
    %c0_i32_1 = arith.constant 0 : i32
    return %c0_i32, %c0_i32_0 : i32, i32
  }
}

module attributes {stable_mosaic.version = 11 : i64} {
  func.func @_misi_kernel(%arg0: i32, %arg1: memref<4x768xf32, #tpu.memory_space<vmem>>, %arg2: memref<4x256xf32, #tpu.memory_space<vmem>>, %arg3: memref<256x768xf32, #tpu.memory_space<vmem>>, %arg4: memref<768x256xf32, #tpu.memory_space<vmem>>, %arg5: memref<4x4xf32, #tpu.memory_space<vmem>>, %arg6: memref<4x256xf32, #tpu.memory_space<vmem>>) attributes {dimension_semantics = [#tpu.dimension_semantics<arbitrary>], iteration_bounds = array<i64: 1>, scalar_prefetch = 0 : i64, scratch_operands = 0 : i64, tpu.core_type = #tpu.core_type<tc>, window_params = [{pipeline_mode = #tpu.pipeline_mode<synchronous>, transform_indices = @transform_0, window_bounds = array<i64: 4, 768>}, {pipeline_mode = #tpu.pipeline_mode<synchronous>, transform_indices = @transform_1, window_bounds = array<i64: 4, 256>}, {pipeline_mode = #tpu.pipeline_mode<synchronous>, transform_indices = @transform_2, window_bounds = array<i64: 256, 768>}, {pipeline_mode = #tpu.pipeline_mode<synchronous>, transform_indices = @transform_3, window_bounds = array<i64: 768, 256>}, {pipeline_mode = #tpu.pipeline_mode<synchronous>, transform_indices = @transform_4, window_bounds = array<i64: 4, 4>}, {pipeline_mode = #tpu.pipeline_mode<synchronous>, transform_indices = @transform_5, window_bounds = array<i64: 4, 256>}]} {
    %c0 = arith.constant 0 : index
    %c0_0 = arith.constant 0 : index
    %0 = vector.load %arg1[%c0, %c0_0] : memref<4x768xf32, #tpu.memory_space<vmem>>, vector<4x768xf32>
    %1 = vector.extract_strided_slice %0 {offsets = [0, 0], sizes = [4, 384], strides = [1, 1]} : vector<4x768xf32> to vector<4x384xf32>
    %2 = vector.extract_strided_slice %0 {offsets = [0, 384], sizes = [4, 384], strides = [1, 1]} : vector<4x768xf32> to vector<4x384xf32>
    %3 = arith.mulf %1, %1 : vector<4x384xf32>
    %4 = arith.mulf %2, %2 : vector<4x384xf32>
    %5 = arith.addf %3, %4 : vector<4x384xf32>
    %6 = math.sqrt %5 : vector<4x384xf32>
    %c0_1 = arith.constant 0 : index
    %c0_2 = arith.constant 0 : index
    %7 = vector.load %arg4[%c0_1, %c0_2] : memref<768x256xf32, #tpu.memory_space<vmem>>, vector<768x256xf32>
    %cst = arith.constant dense<0.000000e+00> : vector<4x256xf32>
    %8 = tpu.matmul %0, %7, %cst {dimension_numbers = #tpu.dot_dimension_numbers<[1], [0], [0], [1], [0, 0, 1, 1], [], []>} : vector<4x768xf32>, vector<768x256xf32>, vector<4x256xf32> -> vector<4x256xf32>
    %c0_3 = arith.constant 0 : index
    %c0_4 = arith.constant 0 : index
    %9 = vector.load %arg5[%c0_3, %c0_4] : memref<4x4xf32, #tpu.memory_space<vmem>>, vector<4x4xf32>
    %cst_5 = arith.constant dense<0.000000e+00> : vector<4x256xf32>
    %10 = tpu.matmul %9, %8, %cst_5 {dimension_numbers = #tpu.dot_dimension_numbers<[1], [0], [0], [1], [0, 0, 1, 1], [], []>} : vector<4x4xf32>, vector<4x256xf32>, vector<4x256xf32> -> vector<4x256xf32>
    %c0_6 = arith.constant 0 : index
    %c0_7 = arith.constant 0 : index
    %11 = vector.load %arg2[%c0_6, %c0_7] : memref<4x256xf32, #tpu.memory_space<vmem>>, vector<4x256xf32>
    %12 = arith.addf %10, %11 : vector<4x256xf32>
    %c0_8 = arith.constant 0 : index
    %c0_9 = arith.constant 0 : index
    %13 = vector.load %arg3[%c0_8, %c0_9] : memref<256x768xf32, #tpu.memory_space<vmem>>, vector<256x768xf32>
    %cst_10 = arith.constant dense<0.000000e+00> : vector<4x768xf32>
    %14 = tpu.matmul %12, %13, %cst_10 {dimension_numbers = #tpu.dot_dimension_numbers<[1], [0], [0], [1], [0, 0, 1, 1], [], []>} : vector<4x256xf32>, vector<256x768xf32>, vector<4x768xf32> -> vector<4x768xf32>
    %15 = vector.extract_strided_slice %14 {offsets = [0, 0], sizes = [4, 384], strides = [1, 1]} : vector<4x768xf32> to vector<4x384xf32>
    %16 = vector.extract_strided_slice %14 {offsets = [0, 384], sizes = [4, 384], strides = [1, 1]} : vector<4x768xf32> to vector<4x384xf32>
    %17 = arith.mulf %15, %15 : vector<4x384xf32>
    %18 = arith.mulf %16, %16 : vector<4x384xf32>
    %19 = arith.addf %17, %18 : vector<4x384xf32>
    %cst_11 = arith.constant 9.99999996E-13 : f32
    %20 = vector.broadcast %cst_11 : f32 to vector<4x384xf32>
    %21 = arith.addf %19, %20 : vector<4x384xf32>
    %22 = math.rsqrt %21 : vector<4x384xf32>
    %23 = arith.mulf %6, %15 : vector<4x384xf32>
    %24 = arith.mulf %23, %22 : vector<4x384xf32>
    %25 = arith.mulf %6, %16 : vector<4x384xf32>
    %26 = arith.mulf %25, %22 : vector<4x384xf32>
    %27 = tpu.concatenate %24, %26 in 1 : vector<4x384xf32>, vector<4x384xf32> -> vector<4x768xf32>
    %c0_12 = arith.constant 0 : index
    %c0_13 = arith.constant 0 : index
    %28 = vector.load %arg4[%c0_12, %c0_13] : memref<768x256xf32, #tpu.memory_space<vmem>>, vector<768x256xf32>
    %cst_14 = arith.constant dense<0.000000e+00> : vector<4x256xf32>
    %29 = tpu.matmul %27, %28, %cst_14 {dimension_numbers = #tpu.dot_dimension_numbers<[1], [0], [0], [1], [0, 0, 1, 1], [], []>} : vector<4x768xf32>, vector<768x256xf32>, vector<4x256xf32> -> vector<4x256xf32>
    %c0_15 = arith.constant 0 : index
    %c0_16 = arith.constant 0 : index
    %30 = vector.load %arg5[%c0_15, %c0_16] : memref<4x4xf32, #tpu.memory_space<vmem>>, vector<4x4xf32>
    %cst_17 = arith.constant dense<0.000000e+00> : vector<4x256xf32>
    %31 = tpu.matmul %30, %29, %cst_17 {dimension_numbers = #tpu.dot_dimension_numbers<[1], [0], [0], [1], [0, 0, 1, 1], [], []>} : vector<4x4xf32>, vector<4x256xf32>, vector<4x256xf32> -> vector<4x256xf32>
    %c0_18 = arith.constant 0 : index
    %c0_19 = arith.constant 0 : index
    %32 = vector.load %arg2[%c0_18, %c0_19] : memref<4x256xf32, #tpu.memory_space<vmem>>, vector<4x256xf32>
    %33 = arith.addf %31, %32 : vector<4x256xf32>
    %c0_20 = arith.constant 0 : index
    %c0_21 = arith.constant 0 : index
    %34 = vector.load %arg6[%c0_20, %c0_21] : memref<4x256xf32, #tpu.memory_space<vmem>>, vector<4x256xf32>
    tpu.vector_store %arg6[%c0_20, %c0_21], %33 {strides = array<i32>} : memref<4x256xf32, #tpu.memory_space<vmem>>, vector<4x256xf32>,
    return
  }
  func.func @transform_0(%arg0: i32) -> (i32, i32) {
    %c0_i32 = arith.constant 0 : i32
    %c0_i32_0 = arith.constant 0 : i32
    %c0_i32_1 = arith.constant 0 : i32
    return %c0_i32, %c0_i32_0 : i32, i32
  }
  func.func @transform_1(%arg0: i32) -> (i32, i32) {
    %c0_i32 = arith.constant 0 : i32
    %c0_i32_0 = arith.constant 0 : i32
    %c0_i32_1 = arith.constant 0 : i32
    return %c0_i32, %c0_i32_0 : i32, i32
  }
  func.func @transform_2(%arg0: i32) -> (i32, i32) {
    %c0_i32 = arith.constant 0 : i32
    %c0_i32_0 = arith.constant 0 : i32
    %c0_i32_1 = arith.constant 0 : i32
    return %c0_i32, %c0_i32_0 : i32, i32
  }
  func.func @transform_3(%arg0: i32) -> (i32, i32) {
    %c0_i32 = arith.constant 0 : i32
    %c0_i32_0 = arith.constant 0 : i32
    %c0_i32_1 = arith.constant 0 : i32
    return %c0_i32, %c0_i32_0 : i32, i32
  }
  func.func @transform_4(%arg0: i32) -> (i32, i32) {
    %c0_i32 = arith.constant 0 : i32
    %c0_i32_0 = arith.constant 0 : i32
    %c0_i32_1 = arith.constant 0 : i32
    return %c0_i32, %c0_i32_0 : i32, i32
  }
  func.func @transform_5(%arg0: i32) -> (i32, i32) {
    %c0_i32 = arith.constant 0 : i32
    %c0_i32_0 = arith.constant 0 : i32
    %c0_i32_1 = arith.constant 0 : i32
    return %c0_i32, %c0_i32_0 : i32, i32
  }
}

</mosaic_0001>

<llo_original>
// kernel: forward.2
$region0: #{forward.2}
  #allocation0 [shape = 'u32[]', space=smem, size = 0x4, offset = 0x4, fixed_abs, tag = 'smem constant byte address 0x4 - core index']
  #allocation1 [shape = 'u32[144,128]{1,0:T(1,128)}', space=vmem, size = 0x12000, scoped, tag = 'internal scratch']
  %s0 = inlined_call_operand.vmem [shape: f32[34,32], index: 0, kind: input, shape index: {}]
  %s1 = inlined_call_operand.vmem [shape: f32[32,256], index: 1, kind: input, shape index: {}]
  %s2 = inlined_call_operand.vmem [shape: f32[128,32], index: 2, kind: input, shape index: {}]
  %s3 = inlined_call_operand.vmem [shape: f32[1,32], index: 3, kind: input, shape index: {}]
  %s4 = inlined_call_operand.vmem [shape: f32[32,512], index: 4, kind: input, shape index: {}]
  %s5 = inlined_call_operand.vmem [shape: f32[1,512], index: 5, kind: input, shape index: {}]
  %s6 = inlined_call_operand.vmem [shape: f32[128,128], index: 6, kind: input, shape index: {}]
  %s7 = inlined_call_operand.vmem [shape: f32[34,640], index: 7, kind: output, shape index: {}]
  %s8 = sld [smem:[#allocation0]]
  $region38: #{forward.2} parent=0
    _
  %s10 = ssub.s32 1, %s8
  %s11 = scalar_select 0, %s10, %s8
  // Predicated region
  $region2: #{forward.2} parent=0 // pred_check
    _
  $region3: #{forward.2} parent=0 // pred_check_branch
    %13 = sbr.rel (0) target = $region5
  $region4: #{forward.2} parent=0 // pred_region
    _
  $region5: #{forward.2} parent=0 // pred_fallthru
    _
  // Predicated region
  $region6: #{forward.2} parent=0 // pred_check
    _
  $region7: #{forward.2} parent=0 // pred_check_branch
    %15 = sbr.rel (0) target = $region9
  $region8: #{forward.2} parent=0 // pred_region
    _
  $region9: #{forward.2} parent=0 // pred_fallthru
    _
  // Predicated region
  $region10: #{forward.2} parent=0 // pred_check
    _
  $region11: #{forward.2} parent=0 // pred_check_branch
    %17 = sbr.rel (0) target = $region13
  $region12: #{forward.2} parent=0 // pred_region
    _
  $region13: #{forward.2} parent=0 // pred_fallthru
    _
  // Predicated region
  $region14: #{forward.2} parent=0 // pred_check
    _
  $region15: #{forward.2} parent=0 // pred_check_branch
    %19 = sbr.rel (0) target = $region17
  $region16: #{forward.2} parent=0 // pred_region
    _
  $region17: #{forward.2} parent=0 // pred_fallthru
    _
  // Predicated region
  $region18: #{forward.2} parent=0 // pred_check
    _
  $region19: #{forward.2} parent=0 // pred_check_branch
    %21 = sbr.rel (0) target = $region21
  $region20: #{forward.2} parent=0 // pred_region
    _
  $region21: #{forward.2} parent=0 // pred_fallthru
    _
  // Predicated region
  $region22: #{forward.2} parent=0 // pred_check
    _
  $region23: #{forward.2} parent=0 // pred_check_branch
    %23 = sbr.rel (0) target = $region25
  $region24: #{forward.2} parent=0 // pred_region
    _
  $region25: #{forward.2} parent=0 // pred_fallthru
    _
  // Predicated region
  $region26: #{forward.2} parent=0 // pred_check
    _
  $region27: #{forward.2} parent=0 // pred_check_branch
    %25 = sbr.rel (0) target = $region29
  $region28: #{forward.2} parent=0 // pred_region
    _
  $region29: #{forward.2} parent=0 // pred_fallthru
    _
  %v26 = vld [vmem:[%s0] sm:$0xff]
  %v27 = vld [vmem:[%s0 + $0x8] sm:$0xff]
  %v28 = vld [vmem:[%s0 + $0x10] sm:$0xff]
  %v29 = vld [vmem:[%s0 + $0x18] sm:$0xff]
  %v30 = vld [vmem:[%s0 + $0x20] sm:$0x3]
  %v31 = vld [vmem:[%s1] sm:$0xff]
  %v32 = vld [vmem:[%s1 + $0x8] sm:$0xff]
  %v33 = vld [vmem:[%s1 + $0x10] sm:$0xff]
  %v34 = vld [vmem:[%s1 + $0x18] sm:$0xff]
  %v35 = vld [vmem:[%s1 + $0x20] sm:$0xff]
  %v36 = vld [vmem:[%s1 + $0x28] sm:$0xff]
  %v37 = vld [vmem:[%s1 + $0x30] sm:$0xff]
  %v38 = vld [vmem:[%s1 + $0x38] sm:$0xff]
  %vm39 = vcmask 261120
  %v41 = vsel %vm39, %v26, 0
  %v44 = vsel %vm39, %v27, 0
  %v47 = vsel %vm39, %v28, 0
  %v50 = vsel %vm39, %v29, 0
  %v53 = vsel %vm39, %v30, 0
  %55 = vmatprep.subr.mxu0 0.0
  %56 = vmatpush1.msra.mxu0 0.0
  %57 = vmatprep.subr.mxu0 0.0
  %58 = vmatpush1.msra.mxu0 0.0
  %59 = vmatprep.subr.mxu0 0.0
  %60 = vmatpush1.msra.mxu0 0.0
  %61 = vmatprep.subr.mxu0 0.0
  %62 = vmatpush1.msra.mxu0 0.0
  %63 = vmatprep.subr.mxu0 0.0
  %64 = vmatpush1.msra.mxu0 0.0
  %65 = vmatprep.subr.mxu0 0.0
  %66 = vmatpush1.msra.mxu0 0.0
  %67 = vmatprep.subr.mxu0 0.0
  %68 = vmatpush1.msra.mxu0 0.0
  %69 = vmatprep.subr.mxu0 0.0
  %70 = vmatpush1.msra.mxu0 0.0
  %71 = vmatprep.subr.mxu0 0.0
  %72 = vmatpush1.msra.mxu0 0.0
  %73 = vmatprep.subr.mxu0 0.0
  %74 = vmatpush1.msra.mxu0 0.0
  %75 = vmatprep.subr.mxu0 0.0
  %76 = vmatpush1.msra.mxu0 0.0
  %77 = vmatprep.subr.mxu0 0.0
  %78 = vmatpush1.msra.mxu0 0.0
  %79 = vmatprep.subr.mxu0 %v38
  %80 = vmatpush1.msra.mxu0 %v37
  %81 = vmatprep.subr.mxu0 %v36
  %82 = vmatpush1.msra.mxu0 %v35
  %83 = vmatprep.subr.mxu0 %v34
  %84 = vmatpush1.msra.mxu0 %v33
  %85 = vmatprep.subr.mxu0 %v32
  %86 = vmatpush1.msra.mxu0 %v31
  %87 = vmatprep.subr.mxu0 0.0
  %88 = vmatpush2.msra.mxu0 0.0
  %89 = vmatprep.subr.mxu0 0.0
  %90 = vmatpush2.msra.mxu0 0.0
  %91 = vmatprep.subr.mxu0 0.0
  %92 = vmatpush2.msra.mxu0 0.0
  %93 = vmatprep.subr.mxu0 0.0
  %94 = vmatpush2.msra.mxu0 0.0
  %95 = vmatprep.subr.mxu0 0.0
  %96 = vmatpush2.msra.mxu0 0.0
  %97 = vmatprep.subr.mxu0 0.0
  %98 = vmatpush2.msra.mxu0 0.0
  %99 = vmatprep.subr.mxu0 0.0
  %100 = vmatpush2.msra.mxu0 0.0
  %101 = vmatprep.subr.mxu0 0.0
  %102 = vmatpush2.msra.mxu0 0.0
  %103 = vmatprep.subr.mxu0 0.0
  %104 = vmatpush2.msra.mxu0 0.0
  %105 = vmatprep.subr.mxu0 0.0
  %106 = vmatpush2.msra.mxu0 0.0
  %107 = vmatprep.subr.mxu0 0.0
  %108 = vmatpush2.msra.mxu0 0.0
  %109 = vmatprep.subr.mxu0 0.0
  %110 = vmatpush2.msra.mxu0 0.0
  %111 = vmatprep.subr.mxu0 0.0
  %112 = vmatpush2.msra.mxu0 0.0
  %113 = vmatprep.subr.mxu0 0.0
  %114 = vmatpush2.msra.mxu0 0.0
  %115 = vmatprep.subr.mxu0 0.0
  %116 = vmatpush2.msra.mxu0 0.0
  %117 = vmatprep.subr.mxu0 0.0
  %118 = vmatpush2.msra.mxu0 0.0
  %119 = vmatprep.mubr.f32.mxu0 0.0
  %120 = vmatmul.mubr.f32.gmra.mxu0 %v41
  %v121 = vpop.f32.mrf.mxu0
  %v122 = vadd.f32 0.0, %v121
  %v123 = vpop.f32.mrf.mxu0
  %v124 = vadd.f32 0.0, %v123
  %125 = vmatprep.mubr.f32.mxu0 0.0
  %126 = vmatmul.mubr.f32.gmra.mxu0 %v44
  %v127 = vpop.f32.mrf.mxu0
  %v128 = vadd.f32 0.0, %v127
  %v129 = vpop.f32.mrf.mxu0
  %v130 = vadd.f32 0.0, %v129
  %131 = vmatprep.mubr.f32.mxu0 0.0
  %132 = vmatmul.mubr.f32.gmra.mxu0 %v47
  %v133 = vpop.f32.mrf.mxu0
  %v134 = vadd.f32 0.0, %v133
  %v135 = vpop.f32.mrf.mxu0
  %v136 = vadd.f32 0.0, %v135
  %137 = vmatprep.mubr.f32.mxu0 0.0
  %138 = vmatmul.mubr.f32.gmra.mxu0 %v50
  %v139 = vpop.f32.mrf.mxu0
  %v140 = vadd.f32 0.0, %v139
  %v141 = vpop.f32.mrf.mxu0
  %v142 = vadd.f32 0.0, %v141
  %143 = vmatprep.mubr.f32.mxu0 0.0
  %144 = vmatmul.mubr.f32.gmra.mxu0 %v53
  %v145 = vpop.f32.mrf.mxu0
  %v146 = vadd.f32 0.0, %v145
  %v147 = vpop.f32.mrf.mxu0
  %v148 = vadd.f32 0.0, %v147
  %149 = vdwg.mxu0
  %v150 = vmul.f32 %v122, %v122
  %v151 = vmul.f32 %v128, %v128
  %v152 = vmul.f32 %v134, %v134
  %v153 = vmul.f32 %v140, %v140
  %v154 = vmul.f32 %v146, %v146
  %v155 = vmul.f32 %v124, %v124
  %v156 = vmul.f32 %v130, %v130
  %v157 = vmul.f32 %v136, %v136
  %v158 = vmul.f32 %v142, %v142
  %v159 = vmul.f32 %v148, %v148
  %v160 = vadd.f32 %v150, %v155
  %v161 = vadd.f32 %v151, %v156
  %v162 = vadd.f32 %v152, %v157
  %v163 = vadd.f32 %v153, %v158
  %v164 = vadd.f32 %v154, %v159
  %v165 = vmax.f32 %v160, 1.2e-38
  %v166 = vmax.f32 %v161, 1.2e-38
  %v167 = vmax.f32 %v162, 1.2e-38
  %v168 = vmax.f32 %v163, 1.2e-38
  %v169 = vmax.f32 %v164, 1.2e-38
  %v170 = vlog2.pop %v165
  %v171 = vmul.f32 %v170, 0.6931472
  %v172 = vlog2.pop %v166
  %v173 = vmul.f32 %v172, 0.6931472
  %v174 = vlog2.pop %v167
  %v175 = vmul.f32 %v174, 0.6931472
  %v176 = vlog2.pop %v168
  %v177 = vmul.f32 %v176, 0.6931472
  %v178 = vlog2.pop %v169
  %v179 = vmul.f32 %v178, 0.6931472
  %v180 = vmul.f32 %v171, 4.3429446
  %v181 = vmul.f32 %v173, 4.3429446
  %v182 = vmul.f32 %v175, 4.3429446
  %v183 = vmul.f32 %v177, 4.3429446
  %v184 = vmul.f32 %v179, 4.3429446
  %v185 = vld [vmem:[%s2] sm:$0xff]
  %v186 = vld [vmem:[%s2 + $0x8] sm:$0xff]
  %v187 = vld [vmem:[%s2 + $0x10] sm:$0xff]
  %v188 = vld [vmem:[%s2 + $0x18] sm:$0xff]
  %v189 = vld [vmem:[%s2 + $0x20] sm:$0xff]
  %v190 = vld [vmem:[%s2 + $0x28] sm:$0xff]
  %v191 = vld [vmem:[%s2 + $0x30] sm:$0xff]
  %v192 = vld [vmem:[%s2 + $0x38] sm:$0xff]
  %v193 = vld [vmem:[%s2 + $0x40] sm:$0xff]
  %v194 = vld [vmem:[%s2 + $0x48] sm:$0xff]
  %v195 = vld [vmem:[%s2 + $0x50] sm:$0xff]
  %v196 = vld [vmem:[%s2 + $0x58] sm:$0xff]
  %v197 = vld [vmem:[%s2 + $0x60] sm:$0xff]
  %v198 = vld [vmem:[%s2 + $0x68] sm:$0xff]
  %v199 = vld [vmem:[%s2 + $0x70] sm:$0xff]
  %v200 = vld [vmem:[%s2 + $0x78] sm:$0xff]
  %v201 = vld [vmem:[%s3] sm:$0x1]
  %v203 = vlaneseq
  %v204 = vshrl.u32 %v203, 7
  %v205 = vsub.s32 0, %v204
  %v206 = vrot.slane %v201, %v205
  %208 = vmatprep.subr.mxu0 0.0
  %209 = vmatpush1.msra.mxu0 %v200
  %210 = vmatprep.subr.mxu0 0.0
  %211 = vmatpush1.msra.mxu0 %v199
  %212 = vmatprep.subr.mxu0 0.0
  %213 = vmatpush1.msra.mxu0 %v198
  %214 = vmatprep.subr.mxu0 0.0
  %215 = vmatpush1.msra.mxu0 %v197
  %216 = vmatprep.subr.mxu0 0.0
  %217 = vmatpush1.msra.mxu0 %v196
  %218 = vmatprep.subr.mxu0 0.0
  %219 = vmatpush1.msra.mxu0 %v195
  %220 = vmatprep.subr.mxu0 0.0
  %221 = vmatpush1.msra.mxu0 %v194
  %222 = vmatprep.subr.mxu0 0.0
  %223 = vmatpush1.msra.mxu0 %v193
  %224 = vmatprep.subr.mxu0 0.0
  %225 = vmatpush1.msra.mxu0 %v192
  %226 = vmatprep.subr.mxu0 0.0
  %227 = vmatpush1.msra.mxu0 %v191
  %228 = vmatprep.subr.mxu0 0.0
  %229 = vmatpush1.msra.mxu0 %v190
  %230 = vmatprep.subr.mxu0 0.0
  %231 = vmatpush1.msra.mxu0 %v189
  %232 = vmatprep.subr.mxu0 0.0
  %233 = vmatpush1.msra.mxu0 %v188
  %234 = vmatprep.subr.mxu0 0.0
  %235 = vmatpush1.msra.mxu0 %v187
  %236 = vmatprep.subr.mxu0 0.0
  %237 = vmatpush1.msra.mxu0 %v186
  %238 = vmatprep.subr.mxu0 0.0
  %239 = vmatpush1.msra.mxu0 %v185
  %240 = vmatprep.subr.mxu0 0.0
  %241 = vmatpush2.msra.mxu0 0.0
  %242 = vmatprep.subr.mxu0 0.0
  %243 = vmatpush2.msra.mxu0 0.0
  %244 = vmatprep.subr.mxu0 0.0
  %245 = vmatpush2.msra.mxu0 0.0
  %246 = vmatprep.subr.mxu0 0.0
  %247 = vmatpush2.msra.mxu0 0.0
  %248 = vmatprep.subr.mxu0 0.0
  %249 = vmatpush2.msra.mxu0 0.0
  %250 = vmatprep.subr.mxu0 0.0
  %251 = vmatpush2.msra.mxu0 0.0
  %252 = vmatprep.subr.mxu0 0.0
  %253 = vmatpush2.msra.mxu0 0.0
  %254 = vmatprep.subr.mxu0 0.0
  %255 = vmatpush2.msra.mxu0 0.0
  %256 = vmatprep.subr.mxu0 0.0
  %257 = vmatpush2.msra.mxu0 0.0
  %258 = vmatprep.subr.mxu0 0.0
  %259 = vmatpush2.msra.mxu0 0.0
  %260 = vmatprep.subr.mxu0 0.0
  %261 = vmatpush2.msra.mxu0 0.0
  %262 = vmatprep.subr.mxu0 0.0
  %263 = vmatpush2.msra.mxu0 0.0
  %264 = vmatprep.subr.mxu0 0.0
  %265 = vmatpush2.msra.mxu0 0.0
  %266 = vmatprep.subr.mxu0 0.0
  %267 = vmatpush2.msra.mxu0 0.0
  %268 = vmatprep.subr.mxu0 0.0
  %269 = vmatpush2.msra.mxu0 0.0
  %270 = vmatprep.subr.mxu0 0.0
  %271 = vmatpush2.msra.mxu0 0.0
  %272 = vmatprep.mubr.f32.mxu0 0.0
  %273 = vmatmul.mubr.f32.gmra.mxu0 %v180
  %v274 = vpop.f32.mrf.mxu0
  %v275 = vadd.f32 %v206, %v274
  %v276 = vpop.f32.mrf.mxu0
  %277 = vmatprep.mubr.f32.mxu0 0.0
  %278 = vmatmul.mubr.f32.gmra.mxu0 %v181
  %v279 = vpop.f32.mrf.mxu0
  %v280 = vadd.f32 %v206, %v279
  %v281 = vpop.f32.mrf.mxu0
  %282 = vmatprep.mubr.f32.mxu0 0.0
  %283 = vmatmul.mubr.f32.gmra.mxu0 %v182
  %v284 = vpop.f32.mrf.mxu0
  %v285 = vadd.f32 %v206, %v284
  %v286 = vpop.f32.mrf.mxu0
  %287 = vmatprep.mubr.f32.mxu0 0.0
  %288 = vmatmul.mubr.f32.gmra.mxu0 %v183
  %v289 = vpop.f32.mrf.mxu0
  %v290 = vadd.f32 %v206, %v289
  %v291 = vpop.f32.mrf.mxu0
  %292 = vmatprep.mubr.f32.mxu0 0.0
  %293 = vmatmul.mubr.f32.gmra.mxu0 %v184
  %v294 = vpop.f32.mrf.mxu0
  %v295 = vadd.f32 %v206, %v294
  %v296 = vpop.f32.mrf.mxu0
  %297 = vdwg.mxu0
  %v298 = vtanh.pop %v275
  %v299 = vtanh.pop %v280
  %v300 = vtanh.pop %v285
  %v301 = vtanh.pop %v290
  %v302 = vtanh.pop %v295
  %v303 = vld [vmem:[%s4] sm:$0xff]
  %v304 = vld [vmem:[%s4 + $0x8] sm:$0xff]
  %v305 = vld [vmem:[%s4 + $0x10] sm:$0xff]
  %v306 = vld [vmem:[%s4 + $0x18] sm:$0xff]
  %v307 = vld [vmem:[%s4 + $0x20] sm:$0xff]
  %v308 = vld [vmem:[%s4 + $0x28] sm:$0xff]
  %v309 = vld [vmem:[%s4 + $0x30] sm:$0xff]
  %v310 = vld [vmem:[%s4 + $0x38] sm:$0xff]
  %v311 = vld [vmem:[%s4 + $0x40] sm:$0xff]
  %v312 = vld [vmem:[%s4 + $0x48] sm:$0xff]
  %v313 = vld [vmem:[%s4 + $0x50] sm:$0xff]
  %v314 = vld [vmem:[%s4 + $0x58] sm:$0xff]
  %v315 = vld [vmem:[%s4 + $0x60] sm:$0xff]
  %v316 = vld [vmem:[%s4 + $0x68] sm:$0xff]
  %v317 = vld [vmem:[%s4 + $0x70] sm:$0xff]
  %v318 = vld [vmem:[%s4 + $0x78] sm:$0xff]
  %v319 = vld [vmem:[%s5] sm:$0xf]
  %v321 = vlaneseq
  %v322 = vshrl.u32 %v321, 7
  %v323 = vsub.s32 0, %v322
  %v324 = vrot.slane %v319, %v323
  %v325 = vlaneseq
  %v326 = vshrl.u32 %v325, 7
  %v327 = vsub.s32 1, %v326
  %v328 = vrot.slane %v319, %v327
  %v329 = vlaneseq
  %v330 = vshrl.u32 %v329, 7
  %v331 = vsub.s32 2, %v330
  %v332 = vrot.slane %v319, %v331
  %v333 = vlaneseq
  %v334 = vshrl.u32 %v333, 7
  %v335 = vsub.s32 3, %v334
  %v336 = vrot.slane %v319, %v335
  %v342 = vsel %vm39, %v298, 0
  %v345 = vsel %vm39, %v299, 0
  %v348 = vsel %vm39, %v300, 0
  %v351 = vsel %vm39, %v301, 0
  %v354 = vsel %vm39, %v302, 0
  %356 = vmatprep.subr.mxu0 0.0
  %357 = vmatpush1.msra.mxu0 0.0
  %358 = vmatprep.subr.mxu0 0.0
  %359 = vmatpush1.msra.mxu0 0.0
  %360 = vmatprep.subr.mxu0 0.0
  %361 = vmatpush1.msra.mxu0 0.0
  %362 = vmatprep.subr.mxu0 0.0
  %363 = vmatpush1.msra.mxu0 0.0
  %364 = vmatprep.subr.mxu0 0.0
  %365 = vmatpush1.msra.mxu0 0.0
  %366 = vmatprep.subr.mxu0 0.0
  %367 = vmatpush1.msra.mxu0 0.0
  %368 = vmatprep.subr.mxu0 0.0
  %369 = vmatpush1.msra.mxu0 0.0
  %370 = vmatprep.subr.mxu0 0.0
  %371 = vmatpush1.msra.mxu0 0.0
  %372 = vmatprep.subr.mxu0 0.0
  %373 = vmatpush1.msra.mxu0 0.0
  %374 = vmatprep.subr.mxu0 0.0
  %375 = vmatpush1.msra.mxu0 0.0
  %376 = vmatprep.subr.mxu0 0.0
  %377 = vmatpush1.msra.mxu0 0.0
  %378 = vmatprep.subr.mxu0 0.0
  %379 = vmatpush1.msra.mxu0 0.0
  %380 = vmatprep.subr.mxu0 %v316
  %381 = vmatpush1.msra.mxu0 %v315
  %382 = vmatprep.subr.mxu0 %v312
  %383 = vmatpush1.msra.mxu0 %v311
  %384 = vmatprep.subr.mxu0 %v308
  %385 = vmatpush1.msra.mxu0 %v307
  %386 = vmatprep.subr.mxu0 %v304
  %387 = vmatpush1.msra.mxu0 %v303
  %388 = vmatprep.subr.mxu0 0.0
  %389 = vmatpush2.msra.mxu0 0.0
  %390 = vmatprep.subr.mxu0 0.0
  %391 = vmatpush2.msra.mxu0 0.0
  %392 = vmatprep.subr.mxu0 0.0
  %393 = vmatpush2.msra.mxu0 0.0
  %394 = vmatprep.subr.mxu0 0.0
  %395 = vmatpush2.msra.mxu0 0.0
  %396 = vmatprep.subr.mxu0 0.0
  %397 = vmatpush2.msra.mxu0 0.0
  %398 = vmatprep.subr.mxu0 0.0
  %399 = vmatpush2.msra.mxu0 0.0
  %400 = vmatprep.subr.mxu0 0.0
  %401 = vmatpush2.msra.mxu0 0.0
  %402 = vmatprep.subr.mxu0 0.0
  %403 = vmatpush2.msra.mxu0 0.0
  %404 = vmatprep.subr.mxu0 0.0
  %405 = vmatpush2.msra.mxu0 0.0
  %406 = vmatprep.subr.mxu0 0.0
  %407 = vmatpush2.msra.mxu0 0.0
  %408 = vmatprep.subr.mxu0 0.0
  %409 = vmatpush2.msra.mxu0 0.0
  %410 = vmatprep.subr.mxu0 0.0
  %411 = vmatpush2.msra.mxu0 0.0
  %412 = vmatprep.subr.mxu0 0.0
  %413 = vmatpush2.msra.mxu0 0.0
  %414 = vmatprep.subr.mxu0 0.0
  %415 = vmatpush2.msra.mxu0 0.0
  %416 = vmatprep.subr.mxu0 0.0
  %417 = vmatpush2.msra.mxu0 0.0
  %418 = vmatprep.subr.mxu0 0.0
  %419 = vmatpush2.msra.mxu0 0.0
  %420 = vmatprep.mubr.f32.mxu0 0.0
  %421 = vmatmul.mubr.f32.gmra.mxu0 %v342
  %v422 = vpop.f32.mrf.mxu0
  %v423 = vadd.f32 %v324, %v422
  %v424 = vpop.f32.mrf.mxu0
  %v425 = vadd.f32 %v328, %v424
  %426 = vmatprep.mubr.f32.mxu0 0.0
  %427 = vmatmul.mubr.f32.gmra.mxu0 %v345
  %v428 = vpop.f32.mrf.mxu0
  %v429 = vadd.f32 %v324, %v428
  %v430 = vpop.f32.mrf.mxu0
  %v431 = vadd.f32 %v328, %v430
  %432 = vmatprep.mubr.f32.mxu0 0.0
  %433 = vmatmul.mubr.f32.gmra.mxu0 %v348
  %v434 = vpop.f32.mrf.mxu0
  %v435 = vadd.f32 %v324, %v434
  %v436 = vpop.f32.mrf.mxu0
  %v437 = vadd.f32 %v328, %v436
  %438 = vmatprep.mubr.f32.mxu0 0.0
  %439 = vmatmul.mubr.f32.gmra.mxu0 %v351
  %v440 = vpop.f32.mrf.mxu0
  %v441 = vadd.f32 %v324, %v440
  %v442 = vpop.f32.mrf.mxu0
  %v443 = vadd.f32 %v328, %v442
  %444 = vmatprep.mubr.f32.mxu0 0.0
  %445 = vmatmul.mubr.f32.gmra.mxu0 %v354
  %v446 = vpop.f32.mrf.mxu0
  %v447 = vadd.f32 %v324, %v446
  %v448 = vpop.f32.mrf.mxu0
  %v449 = vadd.f32 %v328, %v448
  %450 = vdwg.mxu0
  %451 = vmatprep.subr.mxu0 0.0
  %452 = vmatpush1.msra.mxu0 0.0
  %453 = vmatprep.subr.mxu0 0.0
  %454 = vmatpush1.msra.mxu0 0.0
  %455 = vmatprep.subr.mxu0 0.0
  %456 = vmatpush1.msra.mxu0 0.0
  %457 = vmatprep.subr.mxu0 0.0
  %458 = vmatpush1.msra.mxu0 0.0
  %459 = vmatprep.subr.mxu0 0.0
  %460 = vmatpush1.msra.mxu0 0.0
  %461 = vmatprep.subr.mxu0 0.0
  %462 = vmatpush1.msra.mxu0 0.0
  %463 = vmatprep.subr.mxu0 0.0
  %464 = vmatpush1.msra.mxu0 0.0
  %465 = vmatprep.subr.mxu0 0.0
  %466 = vmatpush1.msra.mxu0 0.0
  %467 = vmatprep.subr.mxu0 0.0
  %468 = vmatpush1.msra.mxu0 0.0
  %469 = vmatprep.subr.mxu0 0.0
  %470 = vmatpush1.msra.mxu0 0.0
  %471 = vmatprep.subr.mxu0 0.0
  %472 = vmatpush1.msra.mxu0 0.0
  %473 = vmatprep.subr.mxu0 0.0
  %474 = vmatpush1.msra.mxu0 0.0
  %475 = vmatprep.subr.mxu0 %v318
  %476 = vmatpush1.msra.mxu0 %v317
  %477 = vmatprep.subr.mxu0 %v314
  %478 = vmatpush1.msra.mxu0 %v313
  %479 = vmatprep.subr.mxu0 %v310
  %480 = vmatpush1.msra.mxu0 %v309
  %481 = vmatprep.subr.mxu0 %v306
  %482 = vmatpush1.msra.mxu0 %v305
  %483 = vmatprep.subr.mxu0 0.0
  %484 = vmatpush2.msra.mxu0 0.0
  %485 = vmatprep.subr.mxu0 0.0
  %486 = vmatpush2.msra.mxu0 0.0
  %487 = vmatprep.subr.mxu0 0.0
  %488 = vmatpush2.msra.mxu0 0.0
  %489 = vmatprep.subr.mxu0 0.0
  %490 = vmatpush2.msra.mxu0 0.0
  %491 = vmatprep.subr.mxu0 0.0
  %492 = vmatpush2.msra.mxu0 0.0
  %493 = vmatprep.subr.mxu0 0.0
  %494 = vmatpush2.msra.mxu0 0.0
  %495 = vmatprep.subr.mxu0 0.0
  %496 = vmatpush2.msra.mxu0 0.0
  %497 = vmatprep.subr.mxu0 0.0
  %498 = vmatpush2.msra.mxu0 0.0
  %499 = vmatprep.subr.mxu0 0.0
  %500 = vmatpush2.msra.mxu0 0.0
  %501 = vmatprep.subr.mxu0 0.0
  %502 = vmatpush2.msra.mxu0 0.0
  %503 = vmatprep.subr.mxu0 0.0
  %504 = vmatpush2.msra.mxu0 0.0
  %505 = vmatprep.subr.mxu0 0.0
  %506 = vmatpush2.msra.mxu0 0.0
  %507 = vmatprep.subr.mxu0 0.0
  %508 = vmatpush2.msra.mxu0 0.0
  %509 = vmatprep.subr.mxu0 0.0
  %510 = vmatpush2.msra.mxu0 0.0
  %511 = vmatprep.subr.mxu0 0.0
  %512 = vmatpush2.msra.mxu0 0.0
  %513 = vmatprep.subr.mxu0 0.0
  %514 = vmatpush2.msra.mxu0 0.0
  %515 = vmatprep.mubr.f32.mxu0 0.0
  %516 = vmatmul.mubr.f32.gmra.mxu0 %v342
  %v517 = vpop.f32.mrf.mxu0
  %v518 = vadd.f32 %v332, %v517
  %v519 = vpop.f32.mrf.mxu0
  %v520 = vadd.f32 %v336, %v519
  %521 = vmatprep.mubr.f32.mxu0 0.0
  %522 = vmatmul.mubr.f32.gmra.mxu0 %v345
  %v523 = vpop.f32.mrf.mxu0
  %v524 = vadd.f32 %v332, %v523
  %v525 = vpop.f32.mrf.mxu0
  %v526 = vadd.f32 %v336, %v525
  %527 = vmatprep.mubr.f32.mxu0 0.0
  %528 = vmatmul.mubr.f32.gmra.mxu0 %v348
  %v529 = vpop.f32.mrf.mxu0
  %v530 = vadd.f32 %v332, %v529
  %v531 = vpop.f32.mrf.mxu0
  %v532 = vadd.f32 %v336, %v531
  %533 = vmatprep.mubr.f32.mxu0 0.0
  %534 = vmatmul.mubr.f32.gmra.mxu0 %v351
  %v535 = vpop.f32.mrf.mxu0
  %v536 = vadd.f32 %v332, %v535
  %v537 = vpop.f32.mrf.mxu0
  %v538 = vadd.f32 %v336, %v537
  %539 = vmatprep.mubr.f32.mxu0 0.0
  %540 = vmatmul.mubr.f32.gmra.mxu0 %v354
  %v541 = vpop.f32.mrf.mxu0
  %v542 = vadd.f32 %v332, %v541
  %v543 = vpop.f32.mrf.mxu0
  %v544 = vadd.f32 %v336, %v543
  %545 = vdwg.mxu0
  %v546 = vtanh.pop %v423
  %v547 = vtanh.pop %v429
  %v548 = vtanh.pop %v435
  %v549 = vtanh.pop %v441
  %v550 = vtanh.pop %v447
  %v551 = vxor.u32 %v425, 2147483648
  %v552 = vxor.u32 %v431, 2147483648
  %v553 = vxor.u32 %v437, 2147483648
  %v554 = vxor.u32 %v443, 2147483648
  %v555 = vxor.u32 %v449, 2147483648
  %v556 = vmul.f32 %v551, 1.442695
  %v557 = vpow.pop %v556
  %v558 = vmul.f32 %v552, 1.442695
  %v559 = vpow.pop %v558
  %v560 = vmul.f32 %v553, 1.442695
  %v561 = vpow.pop %v560
  %v562 = vmul.f32 %v554, 1.442695
  %v563 = vpow.pop %v562
  %v564 = vmul.f32 %v555, 1.442695
  %v565 = vpow.pop %v564
  %v566 = vadd.f32 %v557, 1.0
  %v567 = vadd.f32 %v559, 1.0
  %v568 = vadd.f32 %v561, 1.0
  %v569 = vadd.f32 %v563, 1.0
  %v570 = vadd.f32 %v565, 1.0
  %v571 = vrcp.pop %v566
  %v572 = vmul.f32 1.0, %v571
  %v573 = vrcp.pop %v567
  %v574 = vmul.f32 1.0, %v573
  %v575 = vrcp.pop %v568
  %v576 = vmul.f32 1.0, %v575
  %v577 = vrcp.pop %v569
  %v578 = vmul.f32 1.0, %v577
  %v579 = vrcp.pop %v570
  %v580 = vmul.f32 1.0, %v579
  %v581 = vmul.f32 %v518, %v518
  %v582 = vmul.f32 %v524, %v524
  %v583 = vmul.f32 %v530, %v530
  %v584 = vmul.f32 %v536, %v536
  %v585 = vmul.f32 %v542, %v542
  %v586 = vmul.f32 %v520, %v520
  %v587 = vmul.f32 %v526, %v526
  %v588 = vmul.f32 %v532, %v532
  %v589 = vmul.f32 %v538, %v538
  %v590 = vmul.f32 %v544, %v544
  %v591 = vadd.f32 %v581, %v586
  %v592 = vadd.f32 %v582, %v587
  %v593 = vadd.f32 %v583, %v588
  %v594 = vadd.f32 %v584, %v589
  %v595 = vadd.f32 %v585, %v590
  %v596 = vadd.f32 %v591, 1e-08
  %v597 = vadd.f32 %v592, 1e-08
  %v598 = vadd.f32 %v593, 1e-08
  %v599 = vadd.f32 %v594, 1e-08
  %v600 = vadd.f32 %v595, 1e-08
  %v601 = vrsqrt.pop %v596
  %v602 = vrsqrt.pop %v597
  %v603 = vrsqrt.pop %v598
  %v604 = vrsqrt.pop %v599
  %v605 = vrsqrt.pop %v600
  %v606 = vmul.f32 %v572, %v518
  %v607 = vmul.f32 %v574, %v524
  %v608 = vmul.f32 %v576, %v530
  %v609 = vmul.f32 %v578, %v536
  %v610 = vmul.f32 %v580, %v542
  %v611 = vmul.f32 %v606, %v601
  %v612 = vmul.f32 %v607, %v602
  %v613 = vmul.f32 %v608, %v603
  %v614 = vmul.f32 %v609, %v604
  %v615 = vmul.f32 %v610, %v605
  %v616 = vmul.f32 %v572, %v520
  %v617 = vmul.f32 %v574, %v526
  %v618 = vmul.f32 %v576, %v532
  %v619 = vmul.f32 %v578, %v538
  %v620 = vmul.f32 %v580, %v544
  %v621 = vmul.f32 %v616, %v601
  %v622 = vmul.f32 %v617, %v602
  %v623 = vmul.f32 %v618, %v603
  %v624 = vmul.f32 %v619, %v604
  %v625 = vmul.f32 %v620, %v605
  %v626 = vmul.f32 %v546, %v546
  %v627 = vmul.f32 %v547, %v547
  %v628 = vmul.f32 %v548, %v548
  %v629 = vmul.f32 %v549, %v549
  %v630 = vmul.f32 %v550, %v550
  %v631 = vld [vmem:[%s6] sm:$0xff]
  %v632 = vld [vmem:[%s6 + $0x8] sm:$0xff]
  %v633 = vld [vmem:[%s6 + $0x10] sm:$0xff]
  %v634 = vld [vmem:[%s6 + $0x18] sm:$0xff]
  %v635 = vld [vmem:[%s6 + $0x20] sm:$0xff]
  %v636 = vld [vmem:[%s6 + $0x28] sm:$0xff]
  %v637 = vld [vmem:[%s6 + $0x30] sm:$0xff]
  %v638 = vld [vmem:[%s6 + $0x38] sm:$0xff]
  %v639 = vld [vmem:[%s6 + $0x40] sm:$0xff]
  %v640 = vld [vmem:[%s6 + $0x48] sm:$0xff]
  %v641 = vld [vmem:[%s6 + $0x50] sm:$0xff]
  %v642 = vld [vmem:[%s6 + $0x58] sm:$0xff]
  %v643 = vld [vmem:[%s6 + $0x60] sm:$0xff]
  %v644 = vld [vmem:[%s6 + $0x68] sm:$0xff]
  %v645 = vld [vmem:[%s6 + $0x70] sm:$0xff]
  %v646 = vld [vmem:[%s6 + $0x78] sm:$0xff]
  %647 = vmatprep.subr.mxu0 0.0
  %648 = vmatpush1.msra.mxu0 %v646
  %649 = vmatprep.subr.mxu0 0.0
  %650 = vmatpush1.msra.mxu0 %v645
  %651 = vmatprep.subr.mxu0 0.0
  %652 = vmatpush1.msra.mxu0 %v644
  %653 = vmatprep.subr.mxu0 0.0
  %654 = vmatpush1.msra.mxu0 %v643
  %655 = vmatprep.subr.mxu0 0.0
  %656 = vmatpush1.msra.mxu0 %v642
  %657 = vmatprep.subr.mxu0 0.0
  %658 = vmatpush1.msra.mxu0 %v641
  %659 = vmatprep.subr.mxu0 0.0
  %660 = vmatpush1.msra.mxu0 %v640
  %661 = vmatprep.subr.mxu0 0.0
  %662 = vmatpush1.msra.mxu0 %v639
  %663 = vmatprep.subr.mxu0 0.0
  %664 = vmatpush1.msra.mxu0 %v638
  %665 = vmatprep.subr.mxu0 0.0
  %666 = vmatpush1.msra.mxu0 %v637
  %667 = vmatprep.subr.mxu0 0.0
  %668 = vmatpush1.msra.mxu0 %v636
  %669 = vmatprep.subr.mxu0 0.0
  %670 = vmatpush1.msra.mxu0 %v635
  %671 = vmatprep.subr.mxu0 0.0
  %672 = vmatpush1.msra.mxu0 %v634
  %673 = vmatprep.subr.mxu0 0.0
  %674 = vmatpush1.msra.mxu0 %v633
  %675 = vmatprep.subr.mxu0 0.0
  %676 = vmatpush1.msra.mxu0 %v632
  %677 = vmatprep.subr.mxu0 0.0
  %678 = vmatpush1.msra.mxu0 %v631
  %679 = vmatprep.subr.mxu0 0.0
  %680 = vmatpush2.msra.mxu0 0.0
  %681 = vmatprep.subr.mxu0 0.0
  %682 = vmatpush2.msra.mxu0 0.0
  %683 = vmatprep.subr.mxu0 0.0
  %684 = vmatpush2.msra.mxu0 0.0
  %685 = vmatprep.subr.mxu0 0.0
  %686 = vmatpush2.msra.mxu0 0.0
  %687 = vmatprep.subr.mxu0 0.0
  %688 = vmatpush2.msra.mxu0 0.0
  %689 = vmatprep.subr.mxu0 0.0
  %690 = vmatpush2.msra.mxu0 0.0
  %691 = vmatprep.subr.mxu0 0.0
  %692 = vmatpush2.msra.mxu0 0.0
  %693 = vmatprep.subr.mxu0 0.0
  %694 = vmatpush2.msra.mxu0 0.0
  %695 = vmatprep.subr.mxu0 0.0
  %696 = vmatpush2.msra.mxu0 0.0
  %697 = vmatprep.subr.mxu0 0.0
  %698 = vmatpush2.msra.mxu0 0.0
  %699 = vmatprep.subr.mxu0 0.0
  %700 = vmatpush2.msra.mxu0 0.0
  %701 = vmatprep.subr.mxu0 0.0
  %702 = vmatpush2.msra.mxu0 0.0
  %703 = vmatprep.subr.mxu0 0.0
  %704 = vmatpush2.msra.mxu0 0.0
  %705 = vmatprep.subr.mxu0 0.0
  %706 = vmatpush2.msra.mxu0 0.0
  %707 = vmatprep.subr.mxu0 0.0
  %708 = vmatpush2.msra.mxu0 0.0
  %709 = vmatprep.subr.mxu0 0.0
  %710 = vmatpush2.msra.mxu0 0.0
  %711 = vmatprep.mubr.f32.mxu0 0.0
  %712 = vmatmul.mubr.f32.gmra.mxu0 %v626
  %v713 = vpop.f32.mrf.mxu0
  %v714 = vadd.f32 1e-08, %v713
  %v715 = vpop.f32.mrf.mxu0
  %716 = vmatprep.mubr.f32.mxu0 0.0
  %717 = vmatmul.mubr.f32.gmra.mxu0 %v627
  %v718 = vpop.f32.mrf.mxu0
  %v719 = vadd.f32 1e-08, %v718
  %v720 = vpop.f32.mrf.mxu0
  %721 = vmatprep.mubr.f32.mxu0 0.0
  %722 = vmatmul.mubr.f32.gmra.mxu0 %v628
  %v723 = vpop.f32.mrf.mxu0
  %v724 = vadd.f32 1e-08, %v723
  %v725 = vpop.f32.mrf.mxu0
  %726 = vmatprep.mubr.f32.mxu0 0.0
  %727 = vmatmul.mubr.f32.gmra.mxu0 %v629
  %v728 = vpop.f32.mrf.mxu0
  %v729 = vadd.f32 1e-08, %v728
  %v730 = vpop.f32.mrf.mxu0
  %731 = vmatprep.mubr.f32.mxu0 0.0
  %732 = vmatmul.mubr.f32.gmra.mxu0 %v630
  %v733 = vpop.f32.mrf.mxu0
  %v734 = vadd.f32 1e-08, %v733
  %v735 = vpop.f32.mrf.mxu0
  %736 = vdwg.mxu0
  %v737 = vrsqrt.pop %v714
  %v738 = vrsqrt.pop %v719
  %v739 = vrsqrt.pop %v724
  %v740 = vrsqrt.pop %v729
  %v741 = vrsqrt.pop %v734
  %v742 = vmul.f32 %v546, %v737
  %v743 = vmul.f32 %v547, %v738
  %v744 = vmul.f32 %v548, %v739
  %v745 = vmul.f32 %v549, %v740
  %v746 = vmul.f32 %v550, %v741
  %v747 = vmul.f32 %v611, %v122
  %v748 = vmul.f32 %v612, %v128
  %v749 = vmul.f32 %v613, %v134
  %v750 = vmul.f32 %v614, %v140
  %v751 = vmul.f32 %v615, %v146
  %v752 = vmul.f32 %v621, %v124
  %v753 = vmul.f32 %v622, %v130
  %v754 = vmul.f32 %v623, %v136
  %v755 = vmul.f32 %v624, %v142
  %v756 = vmul.f32 %v625, %v148
  %v757 = vsub.f32 %v747, %v752
  %v758 = vsub.f32 %v748, %v753
  %v759 = vsub.f32 %v749, %v754
  %v760 = vsub.f32 %v750, %v755
  %v761 = vsub.f32 %v751, %v756
  %v762 = vmul.f32 %v611, %v124
  %v763 = vmul.f32 %v612, %v130
  %v764 = vmul.f32 %v613, %v136
  %v765 = vmul.f32 %v614, %v142
  %v766 = vmul.f32 %v615, %v148
  %v767 = vmul.f32 %v621, %v122
  %v768 = vmul.f32 %v622, %v128
  %v769 = vmul.f32 %v623, %v134
  %v770 = vmul.f32 %v624, %v140
  %v771 = vmul.f32 %v625, %v146
  %v772 = vadd.f32 %v762, %v767
  %v773 = vadd.f32 %v763, %v768
  %v774 = vadd.f32 %v764, %v769
  %v775 = vadd.f32 %v765, %v770
  %v776 = vadd.f32 %v766, %v771
  %777 = vst [vmem:[%s7] sm:$0xff] %v742
  %778 = vst [vmem:[%s7 + $0x8] sm:$0xff] %v611
  %779 = vst [vmem:[%s7 + $0x10] sm:$0xff] %v621
  %780 = vst [vmem:[%s7 + $0x18] sm:$0xff] %v757
  %781 = vst [vmem:[%s7 + $0x20] sm:$0xff] %v772
  %782 = vst [vmem:[%s7 + $0x28] sm:$0xff] %v743
  %783 = vst [vmem:[%s7 + $0x30] sm:$0xff] %v612
  %784 = vst [vmem:[%s7 + $0x38] sm:$0xff] %v622
  %785 = vst [vmem:[%s7 + $0x40] sm:$0xff] %v758
  %786 = vst [vmem:[%s7 + $0x48] sm:$0xff] %v773
  %787 = vst [vmem:[%s7 + $0x50] sm:$0xff] %v744
  %788 = vst [vmem:[%s7 + $0x58] sm:$0xff] %v613
  %789 = vst [vmem:[%s7 + $0x60] sm:$0xff] %v623
  %790 = vst [vmem:[%s7 + $0x68] sm:$0xff] %v759
  %791 = vst [vmem:[%s7 + $0x70] sm:$0xff] %v774
  %792 = vst [vmem:[%s7 + $0x78] sm:$0xff] %v745
  %793 = vst [vmem:[%s7 + $0x80] sm:$0xff] %v614
  %794 = vst [vmem:[%s7 + $0x88] sm:$0xff] %v624
  %795 = vst [vmem:[%s7 + $0x90] sm:$0xff] %v760
  %796 = vst [vmem:[%s7 + $0x98] sm:$0xff] %v775
  %797 = vst [vmem:[%s7 + $0xa0] sm:$0x3] %v746
  %798 = vst [vmem:[%s7 + $0xa8] sm:$0x3] %v615
  %799 = vst [vmem:[%s7 + $0xb0] sm:$0x3] %v625
  %800 = vst [vmem:[%s7 + $0xb8] sm:$0x3] %v761
  %801 = vst [vmem:[%s7 + $0xc0] sm:$0x3] %v776
  // Predicated region
  $region30: #{forward.2} parent=0 // pred_check
    _
  $region31: #{forward.2} parent=0 // pred_check_branch
    %803 = sbr.rel (0) target = $region33
  $region32: #{forward.2} parent=0 // pred_region
    _
  $region33: #{forward.2} parent=0 // pred_fallthru
    _
  // Predicated region
  $region34: #{forward.2} parent=0 // pred_check
    _
  $region35: #{forward.2} parent=0 // pred_check_branch
    %805 = sbr.rel (0) target = $region37
  $region36: #{forward.2} parent=0 // pred_region
    _
  $region37: #{forward.2} parent=0 // pred_fallthru
    _

// kernel: forward.3
$region0: #{forward.3}
  #allocation0 [shape = 'u32[]', space=smem, size = 0x4, offset = 0x4, fixed_abs, tag = 'smem constant byte address 0x4 - core index']
  #allocation1 [shape = 'u32[144,128]{1,0:T(1,128)}', space=vmem, size = 0x12000, scoped, tag = 'internal scratch']
  %s0 = inlined_call_operand.vmem [shape: f32[4,768], index: 0, kind: input, shape index: {}]
  %s1 = inlined_call_operand.vmem [shape: f32[4,256], index: 1, kind: input, shape index: {}]
  %s2 = inlined_call_operand.vmem [shape: f32[256,768], index: 2, kind: input, shape index: {}]
  %s3 = inlined_call_operand.vmem [shape: f32[768,256], index: 3, kind: input, shape index: {}]
  %s4 = inlined_call_operand.vmem [shape: f32[4,4], index: 4, kind: input, shape index: {}]
  %s5 = inlined_call_operand.vmem [shape: f32[4,256], index: 5, kind: output, shape index: {}]
  %s6 = sld [smem:[#allocation0]]
  $region30: #{forward.3} parent=0
    _
  %s8 = ssub.s32 1, %s6
  %s9 = scalar_select 0, %s8, %s6
  // Predicated region
  $region2: #{forward.3} parent=0 // pred_check
    _
  $region3: #{forward.3} parent=0 // pred_check_branch
    %11 = sbr.rel (0) target = $region5
  $region4: #{forward.3} parent=0 // pred_region
    _
  $region5: #{forward.3} parent=0 // pred_fallthru
    _
  // Predicated region
  $region6: #{forward.3} parent=0 // pred_check
    _
  $region7: #{forward.3} parent=0 // pred_check_branch
    %13 = sbr.rel (0) target = $region9
  $region8: #{forward.3} parent=0 // pred_region
    _
  $region9: #{forward.3} parent=0 // pred_fallthru
    _
  // Predicated region
  $region10: #{forward.3} parent=0 // pred_check
    _
  $region11: #{forward.3} parent=0 // pred_check_branch
    %15 = sbr.rel (0) target = $region13
  $region12: #{forward.3} parent=0 // pred_region
    _
  $region13: #{forward.3} parent=0 // pred_fallthru
    _
  // Predicated region
  $region14: #{forward.3} parent=0 // pred_check
    _
  $region15: #{forward.3} parent=0 // pred_check_branch
    %17 = sbr.rel (0) target = $region17
  $region16: #{forward.3} parent=0 // pred_region
    _
  $region17: #{forward.3} parent=0 // pred_fallthru
    _
  // Predicated region
  $region18: #{forward.3} parent=0 // pred_check
    _
  $region19: #{forward.3} parent=0 // pred_check_branch
    %19 = sbr.rel (0) target = $region21
  $region20: #{forward.3} parent=0 // pred_region
    _
  $region21: #{forward.3} parent=0 // pred_fallthru
    _
  %v20 = vld [vmem:[%s0] sm:$0xff]
  %v21 = vld [vmem:[%s0 + $0x8] sm:$0xff]
  %v22 = vld [vmem:[%s0 + $0x10] sm:$0xff]
  %v23 = vmul.f32 %v20, %v20
  %v24 = vmul.f32 %v21, %v21
  %v27 = vrot.slane %v21, 4
  %v28 = vrot.slane %v22, 4
  %vm29 = vcmask 1043456
  %v30 = vsel %vm29, %v27, %v28
  %v33 = vmul.f32 %v30, %v30
  %v34 = vmul.f32 %v28, %v28
  %v35 = vadd.f32 %v23, %v33
  %v36 = vadd.f32 %v24, %v34
  %v37 = vrsqrt.pop %v35
  %v38 = vmul.f32 %v35, %v37
  %vm39 = vcmp.eq.f32.partialorder %v35, inf
  %v40 = vsel %vm39, %v35, %v38
  %vm41 = vcmp.eq.f32.partialorder %v35, 0.0
  %v42 = vand.u32 %v35, 2147483648
  %v43 = vsel %vm41, %v42, %v40
  %v44 = vrsqrt.pop %v36
  %v45 = vmul.f32 %v36, %v44
  %vm46 = vcmp.eq.f32.partialorder %v36, inf
  %v47 = vsel %vm46, %v36, %v45
  %vm48 = vcmp.eq.f32.partialorder %v36, 0.0
  %v49 = vand.u32 %v36, 2147483648
  %v50 = vsel %vm48, %v49, %v47
  %v51 = vld [vmem:[%s3] sm:$0xff]
  %v52 = vld [vmem:[%s3 + $0x8] sm:$0xff]
  %v53 = vld [vmem:[%s3 + $0x10] sm:$0xff]
  %v54 = vld [vmem:[%s3 + $0x18] sm:$0xff]
  %v55 = vld [vmem:[%s3 + $0x20] sm:$0xff]
  %v56 = vld [vmem:[%s3 + $0x28] sm:$0xff]
  %v57 = vld [vmem:[%s3 + $0x30] sm:$0xff]
  %v58 = vld [vmem:[%s3 + $0x38] sm:$0xff]
  %v59 = vld [vmem:[%s3 + $0x40] sm:$0xff]
  %v60 = vld [vmem:[%s3 + $0x48] sm:$0xff]
  %v61 = vld [vmem:[%s3 + $0x50] sm:$0xff]
  %v62 = vld [vmem:[%s3 + $0x58] sm:$0xff]
  %v63 = vld [vmem:[%s3 + $0x60] sm:$0xff]
  %v64 = vld [vmem:[%s3 + $0x68] sm:$0xff]
  %v65 = vld [vmem:[%s3 + $0x70] sm:$0xff]
  %v66 = vld [vmem:[%s3 + $0x78] sm:$0xff]
  %v67 = vld [vmem:[%s3 + $0x80] sm:$0xff]
  %v68 = vld [vmem:[%s3 + $0x88] sm:$0xff]
  %v69 = vld [vmem:[%s3 + $0x90] sm:$0xff]
  %v70 = vld [vmem:[%s3 + $0x98] sm:$0xff]
  %v71 = vld [vmem:[%s3 + $0xa0] sm:$0xff]
  %v72 = vld [vmem:[%s3 + $0xa8] sm:$0xff]
  %v73 = vld [vmem:[%s3 + $0xb0] sm:$0xff]
  %v74 = vld [vmem:[%s3 + $0xb8] sm:$0xff]
  %v75 = vld [vmem:[%s3 + $0xc0] sm:$0xff]
  %v76 = vld [vmem:[%s3 + $0xc8] sm:$0xff]
  %v77 = vld [vmem:[%s3 + $0xd0] sm:$0xff]
  %v78 = vld [vmem:[%s3 + $0xd8] sm:$0xff]
  %v79 = vld [vmem:[%s3 + $0xe0] sm:$0xff]
  %v80 = vld [vmem:[%s3 + $0xe8] sm:$0xff]
  %v81 = vld [vmem:[%s3 + $0xf0] sm:$0xff]
  %v82 = vld [vmem:[%s3 + $0xf8] sm:$0xff]
  %v83 = vld [vmem:[%s3 + $0x100] sm:$0xff]
  %v84 = vld [vmem:[%s3 + $0x108] sm:$0xff]
  %v85 = vld [vmem:[%s3 + $0x110] sm:$0xff]
  %v86 = vld [vmem:[%s3 + $0x118] sm:$0xff]
  %v87 = vld [vmem:[%s3 + $0x120] sm:$0xff]
  %v88 = vld [vmem:[%s3 + $0x128] sm:$0xff]
  %v89 = vld [vmem:[%s3 + $0x130] sm:$0xff]
  %v90 = vld [vmem:[%s3 + $0x138] sm:$0xff]
  %v91 = vld [vmem:[%s3 + $0x140] sm:$0xff]
  %v92 = vld [vmem:[%s3 + $0x148] sm:$0xff]
  %v93 = vld [vmem:[%s3 + $0x150] sm:$0xff]
  %v94 = vld [vmem:[%s3 + $0x158] sm:$0xff]
  %v95 = vld [vmem:[%s3 + $0x160] sm:$0xff]
  %v96 = vld [vmem:[%s3 + $0x168] sm:$0xff]
  %v97 = vld [vmem:[%s3 + $0x170] sm:$0xff]
  %v98 = vld [vmem:[%s3 + $0x178] sm:$0xff]
  %v99 = vld [vmem:[%s3 + $0x180] sm:$0xff]
  %v100 = vld [vmem:[%s3 + $0x188] sm:$0xff]
  %v101 = vld [vmem:[%s3 + $0x190] sm:$0xff]
  %v102 = vld [vmem:[%s3 + $0x198] sm:$0xff]
  %v103 = vld [vmem:[%s3 + $0x1a0] sm:$0xff]
  %v104 = vld [vmem:[%s3 + $0x1a8] sm:$0xff]
  %v105 = vld [vmem:[%s3 + $0x1b0] sm:$0xff]
  %v106 = vld [vmem:[%s3 + $0x1b8] sm:$0xff]
  %v107 = vld [vmem:[%s3 + $0x1c0] sm:$0xff]
  %v108 = vld [vmem:[%s3 + $0x1c8] sm:$0xff]
  %v109 = vld [vmem:[%s3 + $0x1d0] sm:$0xff]
  %v110 = vld [vmem:[%s3 + $0x1d8] sm:$0xff]
  %v111 = vld [vmem:[%s3 + $0x1e0] sm:$0xff]
  %v112 = vld [vmem:[%s3 + $0x1e8] sm:$0xff]
  %v113 = vld [vmem:[%s3 + $0x1f0] sm:$0xff]
  %v114 = vld [vmem:[%s3 + $0x1f8] sm:$0xff]
  %v115 = vld [vmem:[%s3 + $0x200] sm:$0xff]
  %v116 = vld [vmem:[%s3 + $0x208] sm:$0xff]
  %v117 = vld [vmem:[%s3 + $0x210] sm:$0xff]
  %v118 = vld [vmem:[%s3 + $0x218] sm:$0xff]
  %v119 = vld [vmem:[%s3 + $0x220] sm:$0xff]
  %v120 = vld [vmem:[%s3 + $0x228] sm:$0xff]
  %v121 = vld [vmem:[%s3 + $0x230] sm:$0xff]
  %v122 = vld [vmem:[%s3 + $0x238] sm:$0xff]
  %v123 = vld [vmem:[%s3 + $0x240] sm:$0xff]
  %v124 = vld [vmem:[%s3 + $0x248] sm:$0xff]
  %v125 = vld [vmem:[%s3 + $0x250] sm:$0xff]
  %v126 = vld [vmem:[%s3 + $0x258] sm:$0xff]
  %v127 = vld [vmem:[%s3 + $0x260] sm:$0xff]
  %v128 = vld [vmem:[%s3 + $0x268] sm:$0xff]
  %v129 = vld [vmem:[%s3 + $0x270] sm:$0xff]
  %v130 = vld [vmem:[%s3 + $0x278] sm:$0xff]
  %v131 = vld [vmem:[%s3 + $0x280] sm:$0xff]
  %v132 = vld [vmem:[%s3 + $0x288] sm:$0xff]
  %v133 = vld [vmem:[%s3 + $0x290] sm:$0xff]
  %v134 = vld [vmem:[%s3 + $0x298] sm:$0xff]
  %v135 = vld [vmem:[%s3 + $0x2a0] sm:$0xff]
  %v136 = vld [vmem:[%s3 + $0x2a8] sm:$0xff]
  %v137 = vld [vmem:[%s3 + $0x2b0] sm:$0xff]
  %v138 = vld [vmem:[%s3 + $0x2b8] sm:$0xff]
  %v139 = vld [vmem:[%s3 + $0x2c0] sm:$0xff]
  %v140 = vld [vmem:[%s3 + $0x2c8] sm:$0xff]
  %v141 = vld [vmem:[%s3 + $0x2d0] sm:$0xff]
  %v142 = vld [vmem:[%s3 + $0x2d8] sm:$0xff]
  %v143 = vld [vmem:[%s3 + $0x2e0] sm:$0xff]
  %v144 = vld [vmem:[%s3 + $0x2e8] sm:$0xff]
  %v145 = vld [vmem:[%s3 + $0x2f0] sm:$0xff]
  %v146 = vld [vmem:[%s3 + $0x2f8] sm:$0xff]
  %v147 = vld [vmem:[%s3 + $0x300] sm:$0xff]
  %v148 = vld [vmem:[%s3 + $0x308] sm:$0xff]
  %v149 = vld [vmem:[%s3 + $0x310] sm:$0xff]
  %v150 = vld [vmem:[%s3 + $0x318] sm:$0xff]
  %v151 = vld [vmem:[%s3 + $0x320] sm:$0xff]
  %v152 = vld [vmem:[%s3 + $0x328] sm:$0xff]
  %v153 = vld [vmem:[%s3 + $0x330] sm:$0xff]
  %v154 = vld [vmem:[%s3 + $0x338] sm:$0xff]
  %v155 = vld [vmem:[%s3 + $0x340] sm:$0xff]
  %v156 = vld [vmem:[%s3 + $0x348] sm:$0xff]
  %v157 = vld [vmem:[%s3 + $0x350] sm:$0xff]
  %v158 = vld [vmem:[%s3 + $0x358] sm:$0xff]
  %v159 = vld [vmem:[%s3 + $0x360] sm:$0xff]
  %v160 = vld [vmem:[%s3 + $0x368] sm:$0xff]
  %v161 = vld [vmem:[%s3 + $0x370] sm:$0xff]
  %v162 = vld [vmem:[%s3 + $0x378] sm:$0xff]
  %v163 = vld [vmem:[%s3 + $0x380] sm:$0xff]
  %v164 = vld [vmem:[%s3 + $0x388] sm:$0xff]
  %v165 = vld [vmem:[%s3 + $0x390] sm:$0xff]
  %v166 = vld [vmem:[%s3 + $0x398] sm:$0xff]
  %v167 = vld [vmem:[%s3 + $0x3a0] sm:$0xff]
  %v168 = vld [vmem:[%s3 + $0x3a8] sm:$0xff]
  %v169 = vld [vmem:[%s3 + $0x3b0] sm:$0xff]
  %v170 = vld [vmem:[%s3 + $0x3b8] sm:$0xff]
  %v171 = vld [vmem:[%s3 + $0x3c0] sm:$0xff]
  %v172 = vld [vmem:[%s3 + $0x3c8] sm:$0xff]
  %v173 = vld [vmem:[%s3 + $0x3d0] sm:$0xff]
  %v174 = vld [vmem:[%s3 + $0x3d8] sm:$0xff]
  %v175 = vld [vmem:[%s3 + $0x3e0] sm:$0xff]
  %v176 = vld [vmem:[%s3 + $0x3e8] sm:$0xff]
  %v177 = vld [vmem:[%s3 + $0x3f0] sm:$0xff]
  %v178 = vld [vmem:[%s3 + $0x3f8] sm:$0xff]
  %v179 = vld [vmem:[%s3 + $0x400] sm:$0xff]
  %v180 = vld [vmem:[%s3 + $0x408] sm:$0xff]
  %v181 = vld [vmem:[%s3 + $0x410] sm:$0xff]
  %v182 = vld [vmem:[%s3 + $0x418] sm:$0xff]
  %v183 = vld [vmem:[%s3 + $0x420] sm:$0xff]
  %v184 = vld [vmem:[%s3 + $0x428] sm:$0xff]
  %v185 = vld [vmem:[%s3 + $0x430] sm:$0xff]
  %v186 = vld [vmem:[%s3 + $0x438] sm:$0xff]
  %v187 = vld [vmem:[%s3 + $0x440] sm:$0xff]
  %v188 = vld [vmem:[%s3 + $0x448] sm:$0xff]
  %v189 = vld [vmem:[%s3 + $0x450] sm:$0xff]
  %v190 = vld [vmem:[%s3 + $0x458] sm:$0xff]
  %v191 = vld [vmem:[%s3 + $0x460] sm:$0xff]
  %v192 = vld [vmem:[%s3 + $0x468] sm:$0xff]
  %v193 = vld [vmem:[%s3 + $0x470] sm:$0xff]
  %v194 = vld [vmem:[%s3 + $0x478] sm:$0xff]
  %v195 = vld [vmem:[%s3 + $0x480] sm:$0xff]
  %v196 = vld [vmem:[%s3 + $0x488] sm:$0xff]
  %v197 = vld [vmem:[%s3 + $0x490] sm:$0xff]
  %v198 = vld [vmem:[%s3 + $0x498] sm:$0xff]
  %v199 = vld [vmem:[%s3 + $0x4a0] sm:$0xff]
  %v200 = vld [vmem:[%s3 + $0x4a8] sm:$0xff]
  %v201 = vld [vmem:[%s3 + $0x4b0] sm:$0xff]
  %v202 = vld [vmem:[%s3 + $0x4b8] sm:$0xff]
  %v203 = vld [vmem:[%s3 + $0x4c0] sm:$0xff]
  %v204 = vld [vmem:[%s3 + $0x4c8] sm:$0xff]
  %v205 = vld [vmem:[%s3 + $0x4d0] sm:$0xff]
  %v206 = vld [vmem:[%s3 + $0x4d8] sm:$0xff]
  %v207 = vld [vmem:[%s3 + $0x4e0] sm:$0xff]
  %v208 = vld [vmem:[%s3 + $0x4e8] sm:$0xff]
  %v209 = vld [vmem:[%s3 + $0x4f0] sm:$0xff]
  %v210 = vld [vmem:[%s3 + $0x4f8] sm:$0xff]
  %v211 = vld [vmem:[%s3 + $0x500] sm:$0xff]
  %v212 = vld [vmem:[%s3 + $0x508] sm:$0xff]
  %v213 = vld [vmem:[%s3 + $0x510] sm:$0xff]
  %v214 = vld [vmem:[%s3 + $0x518] sm:$0xff]
  %v215 = vld [vmem:[%s3 + $0x520] sm:$0xff]
  %v216 = vld [vmem:[%s3 + $0x528] sm:$0xff]
  %v217 = vld [vmem:[%s3 + $0x530] sm:$0xff]
  %v218 = vld [vmem:[%s3 + $0x538] sm:$0xff]
  %v219 = vld [vmem:[%s3 + $0x540] sm:$0xff]
  %v220 = vld [vmem:[%s3 + $0x548] sm:$0xff]
  %v221 = vld [vmem:[%s3 + $0x550] sm:$0xff]
  %v222 = vld [vmem:[%s3 + $0x558] sm:$0xff]
  %v223 = vld [vmem:[%s3 + $0x560] sm:$0xff]
  %v224 = vld [vmem:[%s3 + $0x568] sm:$0xff]
  %v225 = vld [vmem:[%s3 + $0x570] sm:$0xff]
  %v226 = vld [vmem:[%s3 + $0x578] sm:$0xff]
  %v227 = vld [vmem:[%s3 + $0x580] sm:$0xff]
  %v228 = vld [vmem:[%s3 + $0x588] sm:$0xff]
  %v229 = vld [vmem:[%s3 + $0x590] sm:$0xff]
  %v230 = vld [vmem:[%s3 + $0x598] sm:$0xff]
  %v231 = vld [vmem:[%s3 + $0x5a0] sm:$0xff]
  %v232 = vld [vmem:[%s3 + $0x5a8] sm:$0xff]
  %v233 = vld [vmem:[%s3 + $0x5b0] sm:$0xff]
  %v234 = vld [vmem:[%s3 + $0x5b8] sm:$0xff]
  %v235 = vld [vmem:[%s3 + $0x5c0] sm:$0xff]
  %v236 = vld [vmem:[%s3 + $0x5c8] sm:$0xff]
  %v237 = vld [vmem:[%s3 + $0x5d0] sm:$0xff]
  %v238 = vld [vmem:[%s3 + $0x5d8] sm:$0xff]
  %v239 = vld [vmem:[%s3 + $0x5e0] sm:$0xff]
  %v240 = vld [vmem:[%s3 + $0x5e8] sm:$0xff]
  %v241 = vld [vmem:[%s3 + $0x5f0] sm:$0xff]
  %v242 = vld [vmem:[%s3 + $0x5f8] sm:$0xff]
  %v244 = vcombine.high %v20, %v20
  %v245 = vcombine.high %v21, %v21
  %v246 = vcombine.high %v22, %v22
  %250 = vmatprep.subr.mxu0 %v82
  %251 = vmatpush1.msra.mxu0 %v81
  %252 = vmatprep.subr.mxu0 %v80
  %253 = vmatpush1.msra.mxu0 %v79
  %254 = vmatprep.subr.mxu0 %v78
  %255 = vmatpush1.msra.mxu0 %v77
  %256 = vmatprep.subr.mxu0 %v76
  %257 = vmatpush1.msra.mxu0 %v75
  %258 = vmatprep.subr.mxu0 %v74
  %259 = vmatpush1.msra.mxu0 %v73
  %260 = vmatprep.subr.mxu0 %v72
  %261 = vmatpush1.msra.mxu0 %v71
  %262 = vmatprep.subr.mxu0 %v70
  %263 = vmatpush1.msra.mxu0 %v69
  %264 = vmatprep.subr.mxu0 %v68
  %265 = vmatpush1.msra.mxu0 %v67
  %266 = vmatprep.subr.mxu0 %v66
  %267 = vmatpush1.msra.mxu0 %v65
  %268 = vmatprep.subr.mxu0 %v64
  %269 = vmatpush1.msra.mxu0 %v63
  %270 = vmatprep.subr.mxu0 %v62
  %271 = vmatpush1.msra.mxu0 %v61
  %272 = vmatprep.subr.mxu0 %v60
  %273 = vmatpush1.msra.mxu0 %v59
  %274 = vmatprep.subr.mxu0 %v58
  %275 = vmatpush1.msra.mxu0 %v57
  %276 = vmatprep.subr.mxu0 %v56
  %277 = vmatpush1.msra.mxu0 %v55
  %278 = vmatprep.subr.mxu0 %v54
  %279 = vmatpush1.msra.mxu0 %v53
  %280 = vmatprep.subr.mxu0 %v52
  %281 = vmatpush1.msra.mxu0 %v51
  %282 = vmatprep.subr.mxu0 %v114
  %283 = vmatpush2.msra.mxu0 %v113
  %284 = vmatprep.subr.mxu0 %v112
  %285 = vmatpush2.msra.mxu0 %v111
  %286 = vmatprep.subr.mxu0 %v110
  %287 = vmatpush2.msra.mxu0 %v109
  %288 = vmatprep.subr.mxu0 %v108
  %289 = vmatpush2.msra.mxu0 %v107
  %290 = vmatprep.subr.mxu0 %v106
  %291 = vmatpush2.msra.mxu0 %v105
  %292 = vmatprep.subr.mxu0 %v104
  %293 = vmatpush2.msra.mxu0 %v103
  %294 = vmatprep.subr.mxu0 %v102
  %295 = vmatpush2.msra.mxu0 %v101
  %296 = vmatprep.subr.mxu0 %v100
  %297 = vmatpush2.msra.mxu0 %v99
  %298 = vmatprep.subr.mxu0 %v98
  %299 = vmatpush2.msra.mxu0 %v97
  %300 = vmatprep.subr.mxu0 %v96
  %301 = vmatpush2.msra.mxu0 %v95
  %302 = vmatprep.subr.mxu0 %v94
  %303 = vmatpush2.msra.mxu0 %v93
  %304 = vmatprep.subr.mxu0 %v92
  %305 = vmatpush2.msra.mxu0 %v91
  %306 = vmatprep.subr.mxu0 %v90
  %307 = vmatpush2.msra.mxu0 %v89
  %308 = vmatprep.subr.mxu0 %v88
  %309 = vmatpush2.msra.mxu0 %v87
  %310 = vmatprep.subr.mxu0 %v86
  %311 = vmatpush2.msra.mxu0 %v85
  %312 = vmatprep.subr.mxu0 %v84
  %313 = vmatpush2.msra.mxu0 %v83
  %314 = vmatprep.mubr.f32.mxu0 %v244
  %315 = vmatmul.mubr.f32.gmra.mxu0 %v20
  %v316 = vpop.f32.mrf.mxu0
  %v317 = vadd.f32 0.0, %v316
  %v318 = vpop.f32.mrf.mxu0
  %v319 = vadd.f32 0.0, %v318
  %320 = vdwg.mxu0
  %321 = vmatprep.subr.mxu0 %v146
  %322 = vmatpush1.msra.mxu0 %v145
  %323 = vmatprep.subr.mxu0 %v144
  %324 = vmatpush1.msra.mxu0 %v143
  %325 = vmatprep.subr.mxu0 %v142
  %326 = vmatpush1.msra.mxu0 %v141
  %327 = vmatprep.subr.mxu0 %v140
  %328 = vmatpush1.msra.mxu0 %v139
  %329 = vmatprep.subr.mxu0 %v138
  %330 = vmatpush1.msra.mxu0 %v137
  %331 = vmatprep.subr.mxu0 %v136
  %332 = vmatpush1.msra.mxu0 %v135
  %333 = vmatprep.subr.mxu0 %v134
  %334 = vmatpush1.msra.mxu0 %v133
  %335 = vmatprep.subr.mxu0 %v132
  %336 = vmatpush1.msra.mxu0 %v131
  %337 = vmatprep.subr.mxu0 %v130
  %338 = vmatpush1.msra.mxu0 %v129
  %339 = vmatprep.subr.mxu0 %v128
  %340 = vmatpush1.msra.mxu0 %v127
  %341 = vmatprep.subr.mxu0 %v126
  %342 = vmatpush1.msra.mxu0 %v125
  %343 = vmatprep.subr.mxu0 %v124
  %344 = vmatpush1.msra.mxu0 %v123
  %345 = vmatprep.subr.mxu0 %v122
  %346 = vmatpush1.msra.mxu0 %v121
  %347 = vmatprep.subr.mxu0 %v120
  %348 = vmatpush1.msra.mxu0 %v119
  %349 = vmatprep.subr.mxu0 %v118
  %350 = vmatpush1.msra.mxu0 %v117
  %351 = vmatprep.subr.mxu0 %v116
  %352 = vmatpush1.msra.mxu0 %v115
  %353 = vmatprep.subr.mxu0 %v178
  %354 = vmatpush2.msra.mxu0 %v177
  %355 = vmatprep.subr.mxu0 %v176
  %356 = vmatpush2.msra.mxu0 %v175
  %357 = vmatprep.subr.mxu0 %v174
  %358 = vmatpush2.msra.mxu0 %v173
  %359 = vmatprep.subr.mxu0 %v172
  %360 = vmatpush2.msra.mxu0 %v171
  %361 = vmatprep.subr.mxu0 %v170
  %362 = vmatpush2.msra.mxu0 %v169
  %363 = vmatprep.subr.mxu0 %v168
  %364 = vmatpush2.msra.mxu0 %v167
  %365 = vmatprep.subr.mxu0 %v166
  %366 = vmatpush2.msra.mxu0 %v165
  %367 = vmatprep.subr.mxu0 %v164
  %368 = vmatpush2.msra.mxu0 %v163
  %369 = vmatprep.subr.mxu0 %v162
  %370 = vmatpush2.msra.mxu0 %v161
  %371 = vmatprep.subr.mxu0 %v160
  %372 = vmatpush2.msra.mxu0 %v159
  %373 = vmatprep.subr.mxu0 %v158
  %374 = vmatpush2.msra.mxu0 %v157
  %375 = vmatprep.subr.mxu0 %v156
  %376 = vmatpush2.msra.mxu0 %v155
  %377 = vmatprep.subr.mxu0 %v154
  %378 = vmatpush2.msra.mxu0 %v153
  %379 = vmatprep.subr.mxu0 %v152
  %380 = vmatpush2.msra.mxu0 %v151
  %381 = vmatprep.subr.mxu0 %v150
  %382 = vmatpush2.msra.mxu0 %v149
  %383 = vmatprep.subr.mxu0 %v148
  %384 = vmatpush2.msra.mxu0 %v147
  %385 = vmatprep.mubr.f32.mxu0 %v245
  %386 = vmatmul.mubr.f32.gmra.mxu0 %v21
  %v387 = vpop.f32.mrf.mxu0
  %v388 = vadd.f32 %v317, %v387
  %v389 = vpop.f32.mrf.mxu0
  %v390 = vadd.f32 %v319, %v389
  %391 = vdwg.mxu0
  %392 = vmatprep.subr.mxu0 %v210
  %393 = vmatpush1.msra.mxu0 %v209
  %394 = vmatprep.subr.mxu0 %v208
  %395 = vmatpush1.msra.mxu0 %v207
  %396 = vmatprep.subr.mxu0 %v206
  %397 = vmatpush1.msra.mxu0 %v205
  %398 = vmatprep.subr.mxu0 %v204
  %399 = vmatpush1.msra.mxu0 %v203
  %400 = vmatprep.subr.mxu0 %v202
  %401 = vmatpush1.msra.mxu0 %v201
  %402 = vmatprep.subr.mxu0 %v200
  %403 = vmatpush1.msra.mxu0 %v199
  %404 = vmatprep.subr.mxu0 %v198
  %405 = vmatpush1.msra.mxu0 %v197
  %406 = vmatprep.subr.mxu0 %v196
  %407 = vmatpush1.msra.mxu0 %v195
  %408 = vmatprep.subr.mxu0 %v194
  %409 = vmatpush1.msra.mxu0 %v193
  %410 = vmatprep.subr.mxu0 %v192
  %411 = vmatpush1.msra.mxu0 %v191
  %412 = vmatprep.subr.mxu0 %v190
  %413 = vmatpush1.msra.mxu0 %v189
  %414 = vmatprep.subr.mxu0 %v188
  %415 = vmatpush1.msra.mxu0 %v187
  %416 = vmatprep.subr.mxu0 %v186
  %417 = vmatpush1.msra.mxu0 %v185
  %418 = vmatprep.subr.mxu0 %v184
  %419 = vmatpush1.msra.mxu0 %v183
  %420 = vmatprep.subr.mxu0 %v182
  %421 = vmatpush1.msra.mxu0 %v181
  %422 = vmatprep.subr.mxu0 %v180
  %423 = vmatpush1.msra.mxu0 %v179
  %424 = vmatprep.subr.mxu0 %v242
  %425 = vmatpush2.msra.mxu0 %v241
  %426 = vmatprep.subr.mxu0 %v240
  %427 = vmatpush2.msra.mxu0 %v239
  %428 = vmatprep.subr.mxu0 %v238
  %429 = vmatpush2.msra.mxu0 %v237
  %430 = vmatprep.subr.mxu0 %v236
  %431 = vmatpush2.msra.mxu0 %v235
  %432 = vmatprep.subr.mxu0 %v234
  %433 = vmatpush2.msra.mxu0 %v233
  %434 = vmatprep.subr.mxu0 %v232
  %435 = vmatpush2.msra.mxu0 %v231
  %436 = vmatprep.subr.mxu0 %v230
  %437 = vmatpush2.msra.mxu0 %v229
  %438 = vmatprep.subr.mxu0 %v228
  %439 = vmatpush2.msra.mxu0 %v227
  %440 = vmatprep.subr.mxu0 %v226
  %441 = vmatpush2.msra.mxu0 %v225
  %442 = vmatprep.subr.mxu0 %v224
  %443 = vmatpush2.msra.mxu0 %v223
  %444 = vmatprep.subr.mxu0 %v222
  %445 = vmatpush2.msra.mxu0 %v221
  %446 = vmatprep.subr.mxu0 %v220
  %447 = vmatpush2.msra.mxu0 %v219
  %448 = vmatprep.subr.mxu0 %v218
  %449 = vmatpush2.msra.mxu0 %v217
  %450 = vmatprep.subr.mxu0 %v216
  %451 = vmatpush2.msra.mxu0 %v215
  %452 = vmatprep.subr.mxu0 %v214
  %453 = vmatpush2.msra.mxu0 %v213
  %454 = vmatprep.subr.mxu0 %v212
  %455 = vmatpush2.msra.mxu0 %v211
  %456 = vmatprep.mubr.f32.mxu0 %v246
  %457 = vmatmul.mubr.f32.gmra.mxu0 %v22
  %v458 = vpop.f32.mrf.mxu0
  %v459 = vadd.f32 %v388, %v458
  %v460 = vpop.f32.mrf.mxu0
  %v461 = vadd.f32 %v390, %v460
  %462 = vdwg.mxu0
  %v463 = vld [vmem:[%s4] sm:$0xf]
  %v464 = vld [vmem:[%s1] sm:$0xff]
  %v466 = vcombine.high %v464, %v464
  %vm468 = vcmask 31744
  %v470 = vsel %vm468, %v463, 0
  %v473 = vsel %vm29, %v459, 0
  %v476 = vsel %vm29, %v461, 0
  %478 = vmatprep.subr.mxu0 0.0
  %479 = vmatpush1.msra.mxu0 0.0
  %480 = vmatprep.subr.mxu0 0.0
  %481 = vmatpush1.msra.mxu0 0.0
  %482 = vmatprep.subr.mxu0 0.0
  %483 = vmatpush1.msra.mxu0 0.0
  %484 = vmatprep.subr.mxu0 0.0
  %485 = vmatpush1.msra.mxu0 0.0
  %486 = vmatprep.subr.mxu0 0.0
  %487 = vmatpush1.msra.mxu0 0.0
  %488 = vmatprep.subr.mxu0 0.0
  %489 = vmatpush1.msra.mxu0 0.0
  %490 = vmatprep.subr.mxu0 0.0
  %491 = vmatpush1.msra.mxu0 0.0
  %492 = vmatprep.subr.mxu0 0.0
  %493 = vmatpush1.msra.mxu0 0.0
  %494 = vmatprep.subr.mxu0 0.0
  %495 = vmatpush1.msra.mxu0 0.0
  %496 = vmatprep.subr.mxu0 0.0
  %497 = vmatpush1.msra.mxu0 0.0
  %498 = vmatprep.subr.mxu0 0.0
  %499 = vmatpush1.msra.mxu0 0.0
  %500 = vmatprep.subr.mxu0 0.0
  %501 = vmatpush1.msra.mxu0 0.0
  %502 = vmatprep.subr.mxu0 0.0
  %503 = vmatpush1.msra.mxu0 0.0
  %504 = vmatprep.subr.mxu0 0.0
  %505 = vmatpush1.msra.mxu0 0.0
  %506 = vmatprep.subr.mxu0 0.0
  %507 = vmatpush1.msra.mxu0 0.0
  %508 = vmatprep.subr.mxu0 %v476
  %509 = vmatpush1.msra.mxu0 %v473
  %510 = vmatprep.subr.mxu0 0.0
  %511 = vmatpush2.msra.mxu0 0.0
  %512 = vmatprep.subr.mxu0 0.0
  %513 = vmatpush2.msra.mxu0 0.0
  %514 = vmatprep.subr.mxu0 0.0
  %515 = vmatpush2.msra.mxu0 0.0
  %516 = vmatprep.subr.mxu0 0.0
  %517 = vmatpush2.msra.mxu0 0.0
  %518 = vmatprep.subr.mxu0 0.0
  %519 = vmatpush2.msra.mxu0 0.0
  %520 = vmatprep.subr.mxu0 0.0
  %521 = vmatpush2.msra.mxu0 0.0
  %522 = vmatprep.subr.mxu0 0.0
  %523 = vmatpush2.msra.mxu0 0.0
  %524 = vmatprep.subr.mxu0 0.0
  %525 = vmatpush2.msra.mxu0 0.0
  %526 = vmatprep.subr.mxu0 0.0
  %527 = vmatpush2.msra.mxu0 0.0
  %528 = vmatprep.subr.mxu0 0.0
  %529 = vmatpush2.msra.mxu0 0.0
  %530 = vmatprep.subr.mxu0 0.0
  %531 = vmatpush2.msra.mxu0 0.0
  %532 = vmatprep.subr.mxu0 0.0
  %533 = vmatpush2.msra.mxu0 0.0
  %534 = vmatprep.subr.mxu0 0.0
  %535 = vmatpush2.msra.mxu0 0.0
  %536 = vmatprep.subr.mxu0 0.0
  %537 = vmatpush2.msra.mxu0 0.0
  %538 = vmatprep.subr.mxu0 0.0
  %539 = vmatpush2.msra.mxu0 0.0
  %540 = vmatprep.subr.mxu0 0.0
  %541 = vmatpush2.msra.mxu0 0.0
  %542 = vmatprep.mubr.f32.mxu0 0.0
  %543 = vmatmul.mubr.f32.gmra.mxu0 %v470
  %v544 = vpop.f32.mrf.mxu0
  %v545 = vadd.f32 %v464, %v544
  %v546 = vpop.f32.mrf.mxu0
  %v547 = vadd.f32 %v466, %v546
  %548 = vdwg.mxu0
  %v549 = vld [vmem:[%s2] sm:$0xff]
  %v550 = vld [vmem:[%s2 + $0x8] sm:$0xff]
  %v551 = vld [vmem:[%s2 + $0x10] sm:$0xff]
  %v552 = vld [vmem:[%s2 + $0x18] sm:$0xff]
  %v553 = vld [vmem:[%s2 + $0x20] sm:$0xff]
  %v554 = vld [vmem:[%s2 + $0x28] sm:$0xff]
  %v555 = vld [vmem:[%s2 + $0x30] sm:$0xff]
  %v556 = vld [vmem:[%s2 + $0x38] sm:$0xff]
  %v557 = vld [vmem:[%s2 + $0x40] sm:$0xff]
  %v558 = vld [vmem:[%s2 + $0x48] sm:$0xff]
  %v559 = vld [vmem:[%s2 + $0x50] sm:$0xff]
  %v560 = vld [vmem:[%s2 + $0x58] sm:$0xff]
  %v561 = vld [vmem:[%s2 + $0x60] sm:$0xff]
  %v562 = vld [vmem:[%s2 + $0x68] sm:$0xff]
  %v563 = vld [vmem:[%s2 + $0x70] sm:$0xff]
  %v564 = vld [vmem:[%s2 + $0x78] sm:$0xff]
  %v565 = vld [vmem:[%s2 + $0x80] sm:$0xff]
  %v566 = vld [vmem:[%s2 + $0x88] sm:$0xff]
  %v567 = vld [vmem:[%s2 + $0x90] sm:$0xff]
  %v568 = vld [vmem:[%s2 + $0x98] sm:$0xff]
  %v569 = vld [vmem:[%s2 + $0xa0] sm:$0xff]
  %v570 = vld [vmem:[%s2 + $0xa8] sm:$0xff]
  %v571 = vld [vmem:[%s2 + $0xb0] sm:$0xff]
  %v572 = vld [vmem:[%s2 + $0xb8] sm:$0xff]
  %v573 = vld [vmem:[%s2 + $0xc0] sm:$0xff]
  %v574 = vld [vmem:[%s2 + $0xc8] sm:$0xff]
  %v575 = vld [vmem:[%s2 + $0xd0] sm:$0xff]
  %v576 = vld [vmem:[%s2 + $0xd8] sm:$0xff]
  %v577 = vld [vmem:[%s2 + $0xe0] sm:$0xff]
  %v578 = vld [vmem:[%s2 + $0xe8] sm:$0xff]
  %v579 = vld [vmem:[%s2 + $0xf0] sm:$0xff]
  %v580 = vld [vmem:[%s2 + $0xf8] sm:$0xff]
  %v581 = vld [vmem:[%s2 + $0x100] sm:$0xff]
  %v582 = vld [vmem:[%s2 + $0x108] sm:$0xff]
  %v583 = vld [vmem:[%s2 + $0x110] sm:$0xff]
  %v584 = vld [vmem:[%s2 + $0x118] sm:$0xff]
  %v585 = vld [vmem:[%s2 + $0x120] sm:$0xff]
  %v586 = vld [vmem:[%s2 + $0x128] sm:$0xff]
  %v587 = vld [vmem:[%s2 + $0x130] sm:$0xff]
  %v588 = vld [vmem:[%s2 + $0x138] sm:$0xff]
  %v589 = vld [vmem:[%s2 + $0x140] sm:$0xff]
  %v590 = vld [vmem:[%s2 + $0x148] sm:$0xff]
  %v591 = vld [vmem:[%s2 + $0x150] sm:$0xff]
  %v592 = vld [vmem:[%s2 + $0x158] sm:$0xff]
  %v593 = vld [vmem:[%s2 + $0x160] sm:$0xff]
  %v594 = vld [vmem:[%s2 + $0x168] sm:$0xff]
  %v595 = vld [vmem:[%s2 + $0x170] sm:$0xff]
  %v596 = vld [vmem:[%s2 + $0x178] sm:$0xff]
  %v597 = vld [vmem:[%s2 + $0x180] sm:$0xff]
  %v598 = vld [vmem:[%s2 + $0x188] sm:$0xff]
  %v599 = vld [vmem:[%s2 + $0x190] sm:$0xff]
  %v600 = vld [vmem:[%s2 + $0x198] sm:$0xff]
  %v601 = vld [vmem:[%s2 + $0x1a0] sm:$0xff]
  %v602 = vld [vmem:[%s2 + $0x1a8] sm:$0xff]
  %v603 = vld [vmem:[%s2 + $0x1b0] sm:$0xff]
  %v604 = vld [vmem:[%s2 + $0x1b8] sm:$0xff]
  %v605 = vld [vmem:[%s2 + $0x1c0] sm:$0xff]
  %v606 = vld [vmem:[%s2 + $0x1c8] sm:$0xff]
  %v607 = vld [vmem:[%s2 + $0x1d0] sm:$0xff]
  %v608 = vld [vmem:[%s2 + $0x1d8] sm:$0xff]
  %v609 = vld [vmem:[%s2 + $0x1e0] sm:$0xff]
  %v610 = vld [vmem:[%s2 + $0x1e8] sm:$0xff]
  %v611 = vld [vmem:[%s2 + $0x1f0] sm:$0xff]
  %v612 = vld [vmem:[%s2 + $0x1f8] sm:$0xff]
  %v613 = vld [vmem:[%s2 + $0x200] sm:$0xff]
  %v614 = vld [vmem:[%s2 + $0x208] sm:$0xff]
  %v615 = vld [vmem:[%s2 + $0x210] sm:$0xff]
  %v616 = vld [vmem:[%s2 + $0x218] sm:$0xff]
  %v617 = vld [vmem:[%s2 + $0x220] sm:$0xff]
  %v618 = vld [vmem:[%s2 + $0x228] sm:$0xff]
  %v619 = vld [vmem:[%s2 + $0x230] sm:$0xff]
  %v620 = vld [vmem:[%s2 + $0x238] sm:$0xff]
  %v621 = vld [vmem:[%s2 + $0x240] sm:$0xff]
  %v622 = vld [vmem:[%s2 + $0x248] sm:$0xff]
  %v623 = vld [vmem:[%s2 + $0x250] sm:$0xff]
  %v624 = vld [vmem:[%s2 + $0x258] sm:$0xff]
  %v625 = vld [vmem:[%s2 + $0x260] sm:$0xff]
  %v626 = vld [vmem:[%s2 + $0x268] sm:$0xff]
  %v627 = vld [vmem:[%s2 + $0x270] sm:$0xff]
  %v628 = vld [vmem:[%s2 + $0x278] sm:$0xff]
  %v629 = vld [vmem:[%s2 + $0x280] sm:$0xff]
  %v630 = vld [vmem:[%s2 + $0x288] sm:$0xff]
  %v631 = vld [vmem:[%s2 + $0x290] sm:$0xff]
  %v632 = vld [vmem:[%s2 + $0x298] sm:$0xff]
  %v633 = vld [vmem:[%s2 + $0x2a0] sm:$0xff]
  %v634 = vld [vmem:[%s2 + $0x2a8] sm:$0xff]
  %v635 = vld [vmem:[%s2 + $0x2b0] sm:$0xff]
  %v636 = vld [vmem:[%s2 + $0x2b8] sm:$0xff]
  %v637 = vld [vmem:[%s2 + $0x2c0] sm:$0xff]
  %v638 = vld [vmem:[%s2 + $0x2c8] sm:$0xff]
  %v639 = vld [vmem:[%s2 + $0x2d0] sm:$0xff]
  %v640 = vld [vmem:[%s2 + $0x2d8] sm:$0xff]
  %v641 = vld [vmem:[%s2 + $0x2e0] sm:$0xff]
  %v642 = vld [vmem:[%s2 + $0x2e8] sm:$0xff]
  %v643 = vld [vmem:[%s2 + $0x2f0] sm:$0xff]
  %v644 = vld [vmem:[%s2 + $0x2f8] sm:$0xff]
  %v645 = vld [vmem:[%s2 + $0x300] sm:$0xff]
  %v646 = vld [vmem:[%s2 + $0x308] sm:$0xff]
  %v647 = vld [vmem:[%s2 + $0x310] sm:$0xff]
  %v648 = vld [vmem:[%s2 + $0x318] sm:$0xff]
  %v649 = vld [vmem:[%s2 + $0x320] sm:$0xff]
  %v650 = vld [vmem:[%s2 + $0x328] sm:$0xff]
  %v651 = vld [vmem:[%s2 + $0x330] sm:$0xff]
  %v652 = vld [vmem:[%s2 + $0x338] sm:$0xff]
  %v653 = vld [vmem:[%s2 + $0x340] sm:$0xff]
  %v654 = vld [vmem:[%s2 + $0x348] sm:$0xff]
  %v655 = vld [vmem:[%s2 + $0x350] sm:$0xff]
  %v656 = vld [vmem:[%s2 + $0x358] sm:$0xff]
  %v657 = vld [vmem:[%s2 + $0x360] sm:$0xff]
  %v658 = vld [vmem:[%s2 + $0x368] sm:$0xff]
  %v659 = vld [vmem:[%s2 + $0x370] sm:$0xff]
  %v660 = vld [vmem:[%s2 + $0x378] sm:$0xff]
  %v661 = vld [vmem:[%s2 + $0x380] sm:$0xff]
  %v662 = vld [vmem:[%s2 + $0x388] sm:$0xff]
  %v663 = vld [vmem:[%s2 + $0x390] sm:$0xff]
  %v664 = vld [vmem:[%s2 + $0x398] sm:$0xff]
  %v665 = vld [vmem:[%s2 + $0x3a0] sm:$0xff]
  %v666 = vld [vmem:[%s2 + $0x3a8] sm:$0xff]
  %v667 = vld [vmem:[%s2 + $0x3b0] sm:$0xff]
  %v668 = vld [vmem:[%s2 + $0x3b8] sm:$0xff]
  %v669 = vld [vmem:[%s2 + $0x3c0] sm:$0xff]
  %v670 = vld [vmem:[%s2 + $0x3c8] sm:$0xff]
  %v671 = vld [vmem:[%s2 + $0x3d0] sm:$0xff]
  %v672 = vld [vmem:[%s2 + $0x3d8] sm:$0xff]
  %v673 = vld [vmem:[%s2 + $0x3e0] sm:$0xff]
  %v674 = vld [vmem:[%s2 + $0x3e8] sm:$0xff]
  %v675 = vld [vmem:[%s2 + $0x3f0] sm:$0xff]
  %v676 = vld [vmem:[%s2 + $0x3f8] sm:$0xff]
  %v677 = vld [vmem:[%s2 + $0x400] sm:$0xff]
  %v678 = vld [vmem:[%s2 + $0x408] sm:$0xff]
  %v679 = vld [vmem:[%s2 + $0x410] sm:$0xff]
  %v680 = vld [vmem:[%s2 + $0x418] sm:$0xff]
  %v681 = vld [vmem:[%s2 + $0x420] sm:$0xff]
  %v682 = vld [vmem:[%s2 + $0x428] sm:$0xff]
  %v683 = vld [vmem:[%s2 + $0x430] sm:$0xff]
  %v684 = vld [vmem:[%s2 + $0x438] sm:$0xff]
  %v685 = vld [vmem:[%s2 + $0x440] sm:$0xff]
  %v686 = vld [vmem:[%s2 + $0x448] sm:$0xff]
  %v687 = vld [vmem:[%s2 + $0x450] sm:$0xff]
  %v688 = vld [vmem:[%s2 + $0x458] sm:$0xff]
  %v689 = vld [vmem:[%s2 + $0x460] sm:$0xff]
  %v690 = vld [vmem:[%s2 + $0x468] sm:$0xff]
  %v691 = vld [vmem:[%s2 + $0x470] sm:$0xff]
  %v692 = vld [vmem:[%s2 + $0x478] sm:$0xff]
  %v693 = vld [vmem:[%s2 + $0x480] sm:$0xff]
  %v694 = vld [vmem:[%s2 + $0x488] sm:$0xff]
  %v695 = vld [vmem:[%s2 + $0x490] sm:$0xff]
  %v696 = vld [vmem:[%s2 + $0x498] sm:$0xff]
  %v697 = vld [vmem:[%s2 + $0x4a0] sm:$0xff]
  %v698 = vld [vmem:[%s2 + $0x4a8] sm:$0xff]
  %v699 = vld [vmem:[%s2 + $0x4b0] sm:$0xff]
  %v700 = vld [vmem:[%s2 + $0x4b8] sm:$0xff]
  %v701 = vld [vmem:[%s2 + $0x4c0] sm:$0xff]
  %v702 = vld [vmem:[%s2 + $0x4c8] sm:$0xff]
  %v703 = vld [vmem:[%s2 + $0x4d0] sm:$0xff]
  %v704 = vld [vmem:[%s2 + $0x4d8] sm:$0xff]
  %v705 = vld [vmem:[%s2 + $0x4e0] sm:$0xff]
  %v706 = vld [vmem:[%s2 + $0x4e8] sm:$0xff]
  %v707 = vld [vmem:[%s2 + $0x4f0] sm:$0xff]
  %v708 = vld [vmem:[%s2 + $0x4f8] sm:$0xff]
  %v709 = vld [vmem:[%s2 + $0x500] sm:$0xff]
  %v710 = vld [vmem:[%s2 + $0x508] sm:$0xff]
  %v711 = vld [vmem:[%s2 + $0x510] sm:$0xff]
  %v712 = vld [vmem:[%s2 + $0x518] sm:$0xff]
  %v713 = vld [vmem:[%s2 + $0x520] sm:$0xff]
  %v714 = vld [vmem:[%s2 + $0x528] sm:$0xff]
  %v715 = vld [vmem:[%s2 + $0x530] sm:$0xff]
  %v716 = vld [vmem:[%s2 + $0x538] sm:$0xff]
  %v717 = vld [vmem:[%s2 + $0x540] sm:$0xff]
  %v718 = vld [vmem:[%s2 + $0x548] sm:$0xff]
  %v719 = vld [vmem:[%s2 + $0x550] sm:$0xff]
  %v720 = vld [vmem:[%s2 + $0x558] sm:$0xff]
  %v721 = vld [vmem:[%s2 + $0x560] sm:$0xff]
  %v722 = vld [vmem:[%s2 + $0x568] sm:$0xff]
  %v723 = vld [vmem:[%s2 + $0x570] sm:$0xff]
  %v724 = vld [vmem:[%s2 + $0x578] sm:$0xff]
  %v725 = vld [vmem:[%s2 + $0x580] sm:$0xff]
  %v726 = vld [vmem:[%s2 + $0x588] sm:$0xff]
  %v727 = vld [vmem:[%s2 + $0x590] sm:$0xff]
  %v728 = vld [vmem:[%s2 + $0x598] sm:$0xff]
  %v729 = vld [vmem:[%s2 + $0x5a0] sm:$0xff]
  %v730 = vld [vmem:[%s2 + $0x5a8] sm:$0xff]
  %v731 = vld [vmem:[%s2 + $0x5b0] sm:$0xff]
  %v732 = vld [vmem:[%s2 + $0x5b8] sm:$0xff]
  %v733 = vld [vmem:[%s2 + $0x5c0] sm:$0xff]
  %v734 = vld [vmem:[%s2 + $0x5c8] sm:$0xff]
  %v735 = vld [vmem:[%s2 + $0x5d0] sm:$0xff]
  %v736 = vld [vmem:[%s2 + $0x5d8] sm:$0xff]
  %v737 = vld [vmem:[%s2 + $0x5e0] sm:$0xff]
  %v738 = vld [vmem:[%s2 + $0x5e8] sm:$0xff]
  %v739 = vld [vmem:[%s2 + $0x5f0] sm:$0xff]
  %v740 = vld [vmem:[%s2 + $0x5f8] sm:$0xff]
  %741 = vmatprep.subr.mxu0 %v640
  %742 = vmatpush1.msra.mxu0 %v639
  %743 = vmatprep.subr.mxu0 %v634
  %744 = vmatpush1.msra.mxu0 %v633
  %745 = vmatprep.subr.mxu0 %v628
  %746 = vmatpush1.msra.mxu0 %v627
  %747 = vmatprep.subr.mxu0 %v622
  %748 = vmatpush1.msra.mxu0 %v621
  %749 = vmatprep.subr.mxu0 %v616
  %750 = vmatpush1.msra.mxu0 %v615
  %751 = vmatprep.subr.mxu0 %v610
  %752 = vmatpush1.msra.mxu0 %v609
  %753 = vmatprep.subr.mxu0 %v604
  %754 = vmatpush1.msra.mxu0 %v603
  %755 = vmatprep.subr.mxu0 %v598
  %756 = vmatpush1.msra.mxu0 %v597
  %757 = vmatprep.subr.mxu0 %v592
  %758 = vmatpush1.msra.mxu0 %v591
  %759 = vmatprep.subr.mxu0 %v586
  %760 = vmatpush1.msra.mxu0 %v585
  %761 = vmatprep.subr.mxu0 %v580
  %762 = vmatpush1.msra.mxu0 %v579
  %763 = vmatprep.subr.mxu0 %v574
  %764 = vmatpush1.msra.mxu0 %v573
  %765 = vmatprep.subr.mxu0 %v568
  %766 = vmatpush1.msra.mxu0 %v567
  %767 = vmatprep.subr.mxu0 %v562
  %768 = vmatpush1.msra.mxu0 %v561
  %769 = vmatprep.subr.mxu0 %v556
  %770 = vmatpush1.msra.mxu0 %v555
  %771 = vmatprep.subr.mxu0 %v550
  %772 = vmatpush1.msra.mxu0 %v549
  %773 = vmatprep.subr.mxu0 %v736
  %774 = vmatpush2.msra.mxu0 %v735
  %775 = vmatprep.subr.mxu0 %v730
  %776 = vmatpush2.msra.mxu0 %v729
  %777 = vmatprep.subr.mxu0 %v724
  %778 = vmatpush2.msra.mxu0 %v723
  %779 = vmatprep.subr.mxu0 %v718
  %780 = vmatpush2.msra.mxu0 %v717
  %781 = vmatprep.subr.mxu0 %v712
  %782 = vmatpush2.msra.mxu0 %v711
  %783 = vmatprep.subr.mxu0 %v706
  %784 = vmatpush2.msra.mxu0 %v705
  %785 = vmatprep.subr.mxu0 %v700
  %786 = vmatpush2.msra.mxu0 %v699
  %787 = vmatprep.subr.mxu0 %v694
  %788 = vmatpush2.msra.mxu0 %v693
  %789 = vmatprep.subr.mxu0 %v688
  %790 = vmatpush2.msra.mxu0 %v687
  %791 = vmatprep.subr.mxu0 %v682
  %792 = vmatpush2.msra.mxu0 %v681
  %793 = vmatprep.subr.mxu0 %v676
  %794 = vmatpush2.msra.mxu0 %v675
  %795 = vmatprep.subr.mxu0 %v670
  %796 = vmatpush2.msra.mxu0 %v669
  %797 = vmatprep.subr.mxu0 %v664
  %798 = vmatpush2.msra.mxu0 %v663
  %799 = vmatprep.subr.mxu0 %v658
  %800 = vmatpush2.msra.mxu0 %v657
  %801 = vmatprep.subr.mxu0 %v652
  %802 = vmatpush2.msra.mxu0 %v651
  %803 = vmatprep.subr.mxu0 %v646
  %804 = vmatpush2.msra.mxu0 %v645
  %805 = vmatprep.mubr.f32.mxu0 %v547
  %806 = vmatmul.mubr.f32.gmra.mxu0 %v545
  %v807 = vpop.f32.mrf.mxu0
  %v808 = vadd.f32 0.0, %v807
  %v809 = vpop.f32.mrf.mxu0
  %v810 = vadd.f32 0.0, %v809
  %811 = vdwg.mxu0
  %812 = vmatprep.subr.mxu0 %v642
  %813 = vmatpush1.msra.mxu0 %v641
  %814 = vmatprep.subr.mxu0 %v636
  %815 = vmatpush1.msra.mxu0 %v635
  %816 = vmatprep.subr.mxu0 %v630
  %817 = vmatpush1.msra.mxu0 %v629
  %818 = vmatprep.subr.mxu0 %v624
  %819 = vmatpush1.msra.mxu0 %v623
  %820 = vmatprep.subr.mxu0 %v618
  %821 = vmatpush1.msra.mxu0 %v617
  %822 = vmatprep.subr.mxu0 %v612
  %823 = vmatpush1.msra.mxu0 %v611
  %824 = vmatprep.subr.mxu0 %v606
  %825 = vmatpush1.msra.mxu0 %v605
  %826 = vmatprep.subr.mxu0 %v600
  %827 = vmatpush1.msra.mxu0 %v599
  %828 = vmatprep.subr.mxu0 %v594
  %829 = vmatpush1.msra.mxu0 %v593
  %830 = vmatprep.subr.mxu0 %v588
  %831 = vmatpush1.msra.mxu0 %v587
  %832 = vmatprep.subr.mxu0 %v582
  %833 = vmatpush1.msra.mxu0 %v581
  %834 = vmatprep.subr.mxu0 %v576
  %835 = vmatpush1.msra.mxu0 %v575
  %836 = vmatprep.subr.mxu0 %v570
  %837 = vmatpush1.msra.mxu0 %v569
  %838 = vmatprep.subr.mxu0 %v564
  %839 = vmatpush1.msra.mxu0 %v563
  %840 = vmatprep.subr.mxu0 %v558
  %841 = vmatpush1.msra.mxu0 %v557
  %842 = vmatprep.subr.mxu0 %v552
  %843 = vmatpush1.msra.mxu0 %v551
  %844 = vmatprep.subr.mxu0 %v738
  %845 = vmatpush2.msra.mxu0 %v737
  %846 = vmatprep.subr.mxu0 %v732
  %847 = vmatpush2.msra.mxu0 %v731
  %848 = vmatprep.subr.mxu0 %v726
  %849 = vmatpush2.msra.mxu0 %v725
  %850 = vmatprep.subr.mxu0 %v720
  %851 = vmatpush2.msra.mxu0 %v719
  %852 = vmatprep.subr.mxu0 %v714
  %853 = vmatpush2.msra.mxu0 %v713
  %854 = vmatprep.subr.mxu0 %v708
  %855 = vmatpush2.msra.mxu0 %v707
  %856 = vmatprep.subr.mxu0 %v702
  %857 = vmatpush2.msra.mxu0 %v701
  %858 = vmatprep.subr.mxu0 %v696
  %859 = vmatpush2.msra.mxu0 %v695
  %860 = vmatprep.subr.mxu0 %v690
  %861 = vmatpush2.msra.mxu0 %v689
  %862 = vmatprep.subr.mxu0 %v684
  %863 = vmatpush2.msra.mxu0 %v683
  %864 = vmatprep.subr.mxu0 %v678
  %865 = vmatpush2.msra.mxu0 %v677
  %866 = vmatprep.subr.mxu0 %v672
  %867 = vmatpush2.msra.mxu0 %v671
  %868 = vmatprep.subr.mxu0 %v666
  %869 = vmatpush2.msra.mxu0 %v665
  %870 = vmatprep.subr.mxu0 %v660
  %871 = vmatpush2.msra.mxu0 %v659
  %872 = vmatprep.subr.mxu0 %v654
  %873 = vmatpush2.msra.mxu0 %v653
  %874 = vmatprep.subr.mxu0 %v648
  %875 = vmatpush2.msra.mxu0 %v647
  %876 = vmatprep.mubr.f32.mxu0 %v547
  %877 = vmatmul.mubr.f32.gmra.mxu0 %v545
  %v878 = vpop.f32.mrf.mxu0
  %v879 = vadd.f32 0.0, %v878
  %v880 = vpop.f32.mrf.mxu0
  %v881 = vadd.f32 0.0, %v880
  %882 = vdwg.mxu0
  %883 = vmatprep.subr.mxu0 %v644
  %884 = vmatpush1.msra.mxu0 %v643
  %885 = vmatprep.subr.mxu0 %v638
  %886 = vmatpush1.msra.mxu0 %v637
  %887 = vmatprep.subr.mxu0 %v632
  %888 = vmatpush1.msra.mxu0 %v631
  %889 = vmatprep.subr.mxu0 %v626
  %890 = vmatpush1.msra.mxu0 %v625
  %891 = vmatprep.subr.mxu0 %v620
  %892 = vmatpush1.msra.mxu0 %v619
  %893 = vmatprep.subr.mxu0 %v614
  %894 = vmatpush1.msra.mxu0 %v613
  %895 = vmatprep.subr.mxu0 %v608
  %896 = vmatpush1.msra.mxu0 %v607
  %897 = vmatprep.subr.mxu0 %v602
  %898 = vmatpush1.msra.mxu0 %v601
  %899 = vmatprep.subr.mxu0 %v596
  %900 = vmatpush1.msra.mxu0 %v595
  %901 = vmatprep.subr.mxu0 %v590
  %902 = vmatpush1.msra.mxu0 %v589
  %903 = vmatprep.subr.mxu0 %v584
  %904 = vmatpush1.msra.mxu0 %v583
  %905 = vmatprep.subr.mxu0 %v578
  %906 = vmatpush1.msra.mxu0 %v577
  %907 = vmatprep.subr.mxu0 %v572
  %908 = vmatpush1.msra.mxu0 %v571
  %909 = vmatprep.subr.mxu0 %v566
  %910 = vmatpush1.msra.mxu0 %v565
  %911 = vmatprep.subr.mxu0 %v560
  %912 = vmatpush1.msra.mxu0 %v559
  %913 = vmatprep.subr.mxu0 %v554
  %914 = vmatpush1.msra.mxu0 %v553
  %915 = vmatprep.subr.mxu0 %v740
  %916 = vmatpush2.msra.mxu0 %v739
  %917 = vmatprep.subr.mxu0 %v734
  %918 = vmatpush2.msra.mxu0 %v733
  %919 = vmatprep.subr.mxu0 %v728
  %920 = vmatpush2.msra.mxu0 %v727
  %921 = vmatprep.subr.mxu0 %v722
  %922 = vmatpush2.msra.mxu0 %v721
  %923 = vmatprep.subr.mxu0 %v716
  %924 = vmatpush2.msra.mxu0 %v715
  %925 = vmatprep.subr.mxu0 %v710
  %926 = vmatpush2.msra.mxu0 %v709
  %927 = vmatprep.subr.mxu0 %v704
  %928 = vmatpush2.msra.mxu0 %v703
  %929 = vmatprep.subr.mxu0 %v698
  %930 = vmatpush2.msra.mxu0 %v697
  %931 = vmatprep.subr.mxu0 %v692
  %932 = vmatpush2.msra.mxu0 %v691
  %933 = vmatprep.subr.mxu0 %v686
  %934 = vmatpush2.msra.mxu0 %v685
  %935 = vmatprep.subr.mxu0 %v680
  %936 = vmatpush2.msra.mxu0 %v679
  %937 = vmatprep.subr.mxu0 %v674
  %938 = vmatpush2.msra.mxu0 %v673
  %939 = vmatprep.subr.mxu0 %v668
  %940 = vmatpush2.msra.mxu0 %v667
  %941 = vmatprep.subr.mxu0 %v662
  %942 = vmatpush2.msra.mxu0 %v661
  %943 = vmatprep.subr.mxu0 %v656
  %944 = vmatpush2.msra.mxu0 %v655
  %945 = vmatprep.subr.mxu0 %v650
  %946 = vmatpush2.msra.mxu0 %v649
  %947 = vmatprep.mubr.f32.mxu0 %v547
  %948 = vmatmul.mubr.f32.gmra.mxu0 %v545
  %v949 = vpop.f32.mrf.mxu0
  %v950 = vadd.f32 0.0, %v949
  %v951 = vpop.f32.mrf.mxu0
  %v952 = vadd.f32 0.0, %v951
  %953 = vdwg.mxu0
  %v954 = vmul.f32 %v808, %v808
  %v955 = vmul.f32 %v810, %v810
  %v956 = vmul.f32 %v879, %v879
  %v957 = vmul.f32 %v881, %v881
  %v958 = vmul.f32 %v950, %v950
  %v959 = vmul.f32 %v952, %v952
  %v960 = vadd.f32 %v954, %v957
  %v961 = vadd.f32 %v955, %v958
  %v962 = vadd.f32 %v956, %v959
  %v963 = vadd.f32 %v960, 1e-12
  %v964 = vadd.f32 %v961, 1e-12
  %v965 = vadd.f32 %v962, 1e-12
  %v966 = vrsqrt.pop %v963
  %v967 = vrsqrt.pop %v964
  %v968 = vrsqrt.pop %v965
  %v971 = vcombine.low %v808, %v810
  %v973 = vmul.f32 %v43, %v971
  %v974 = vmul.f32 %v50, %v879
  %v977 = vcombine.low %v966, %v967
  %v979 = vmul.f32 %v973, %v977
  %v980 = vmul.f32 %v974, %v968
  %v983 = vcombine.low %v881, %v950
  %v985 = vmul.f32 %v43, %v983
  %v986 = vmul.f32 %v50, %v952
  %v987 = vmul.f32 %v985, %v977
  %v988 = vmul.f32 %v986, %v968
  %v990 = vcombine.high %v979, %v979
  %v993 = vcombine.high %v987, %v987
  %995 = vmatprep.subr.mxu0 %v82
  %996 = vmatpush1.msra.mxu0 %v81
  %997 = vmatprep.subr.mxu0 %v80
  %998 = vmatpush1.msra.mxu0 %v79
  %999 = vmatprep.subr.mxu0 %v78
  %1000 = vmatpush1.msra.mxu0 %v77
  %1001 = vmatprep.subr.mxu0 %v76
  %1002 = vmatpush1.msra.mxu0 %v75
  %1003 = vmatprep.subr.mxu0 %v74
  %1004 = vmatpush1.msra.mxu0 %v73
  %1005 = vmatprep.subr.mxu0 %v72
  %1006 = vmatpush1.msra.mxu0 %v71
  %1007 = vmatprep.subr.mxu0 %v70
  %1008 = vmatpush1.msra.mxu0 %v69
  %1009 = vmatprep.subr.mxu0 %v68
  %1010 = vmatpush1.msra.mxu0 %v67
  %1011 = vmatprep.subr.mxu0 %v66
  %1012 = vmatpush1.msra.mxu0 %v65
  %1013 = vmatprep.subr.mxu0 %v64
  %1014 = vmatpush1.msra.mxu0 %v63
  %1015 = vmatprep.subr.mxu0 %v62
  %1016 = vmatpush1.msra.mxu0 %v61
  %1017 = vmatprep.subr.mxu0 %v60
  %1018 = vmatpush1.msra.mxu0 %v59
  %1019 = vmatprep.subr.mxu0 %v58
  %1020 = vmatpush1.msra.mxu0 %v57
  %1021 = vmatprep.subr.mxu0 %v56
  %1022 = vmatpush1.msra.mxu0 %v55
  %1023 = vmatprep.subr.mxu0 %v54
  %1024 = vmatpush1.msra.mxu0 %v53
  %1025 = vmatprep.subr.mxu0 %v52
  %1026 = vmatpush1.msra.mxu0 %v51
  %1027 = vmatprep.subr.mxu0 %v114
  %1028 = vmatpush2.msra.mxu0 %v113
  %1029 = vmatprep.subr.mxu0 %v112
  %1030 = vmatpush2.msra.mxu0 %v111
  %1031 = vmatprep.subr.mxu0 %v110
  %1032 = vmatpush2.msra.mxu0 %v109
  %1033 = vmatprep.subr.mxu0 %v108
  %1034 = vmatpush2.msra.mxu0 %v107
  %1035 = vmatprep.subr.mxu0 %v106
  %1036 = vmatpush2.msra.mxu0 %v105
  %1037 = vmatprep.subr.mxu0 %v104
  %1038 = vmatpush2.msra.mxu0 %v103
  %1039 = vmatprep.subr.mxu0 %v102
  %1040 = vmatpush2.msra.mxu0 %v101
  %1041 = vmatprep.subr.mxu0 %v100
  %1042 = vmatpush2.msra.mxu0 %v99
  %1043 = vmatprep.subr.mxu0 %v98
  %1044 = vmatpush2.msra.mxu0 %v97
  %1045 = vmatprep.subr.mxu0 %v96
  %1046 = vmatpush2.msra.mxu0 %v95
  %1047 = vmatprep.subr.mxu0 %v94
  %1048 = vmatpush2.msra.mxu0 %v93
  %1049 = vmatprep.subr.mxu0 %v92
  %1050 = vmatpush2.msra.mxu0 %v91
  %1051 = vmatprep.subr.mxu0 %v90
  %1052 = vmatpush2.msra.mxu0 %v89
  %1053 = vmatprep.subr.mxu0 %v88
  %1054 = vmatpush2.msra.mxu0 %v87
  %1055 = vmatprep.subr.mxu0 %v86
  %1056 = vmatpush2.msra.mxu0 %v85
  %1057 = vmatprep.subr.mxu0 %v84
  %1058 = vmatpush2.msra.mxu0 %v83
  %1059 = vmatprep.mubr.f32.mxu0 %v990
  %1060 = vmatmul.mubr.f32.gmra.mxu0 %v979
  %v1061 = vpop.f32.mrf.mxu0
  %v1062 = vadd.f32 0.0, %v1061
  %v1063 = vpop.f32.mrf.mxu0
  %v1064 = vadd.f32 0.0, %v1063
  %1065 = vdwg.mxu0
  %1066 = vmatprep.subr.mxu0 %v146
  %1067 = vmatpush1.msra.mxu0 %v145
  %1068 = vmatprep.subr.mxu0 %v144
  %1069 = vmatpush1.msra.mxu0 %v143
  %1070 = vmatprep.subr.mxu0 %v142
  %1071 = vmatpush1.msra.mxu0 %v141
  %1072 = vmatprep.subr.mxu0 %v140
  %1073 = vmatpush1.msra.mxu0 %v139
  %1074 = vmatprep.subr.mxu0 %v138
  %1075 = vmatpush1.msra.mxu0 %v137
  %1076 = vmatprep.subr.mxu0 %v136
  %1077 = vmatpush1.msra.mxu0 %v135
  %1078 = vmatprep.subr.mxu0 %v134
  %1079 = vmatpush1.msra.mxu0 %v133
  %1080 = vmatprep.subr.mxu0 %v132
  %1081 = vmatpush1.msra.mxu0 %v131
  %1082 = vmatprep.subr.mxu0 %v130
  %1083 = vmatpush1.msra.mxu0 %v129
  %1084 = vmatprep.subr.mxu0 %v128
  %1085 = vmatpush1.msra.mxu0 %v127
  %1086 = vmatprep.subr.mxu0 %v126
  %1087 = vmatpush1.msra.mxu0 %v125
  %1088 = vmatprep.subr.mxu0 %v124
  %1089 = vmatpush1.msra.mxu0 %v123
  %1090 = vmatprep.subr.mxu0 %v122
  %1091 = vmatpush1.msra.mxu0 %v121
  %1092 = vmatprep.subr.mxu0 %v120
  %1093 = vmatpush1.msra.mxu0 %v119
  %1094 = vmatprep.subr.mxu0 %v118
  %1095 = vmatpush1.msra.mxu0 %v117
  %1096 = vmatprep.subr.mxu0 %v116
  %1097 = vmatpush1.msra.mxu0 %v115
  %1098 = vmatprep.subr.mxu0 %v178
  %1099 = vmatpush2.msra.mxu0 %v177
  %1100 = vmatprep.subr.mxu0 %v176
  %1101 = vmatpush2.msra.mxu0 %v175
  %1102 = vmatprep.subr.mxu0 %v174
  %1103 = vmatpush2.msra.mxu0 %v173
  %1104 = vmatprep.subr.mxu0 %v172
  %1105 = vmatpush2.msra.mxu0 %v171
  %1106 = vmatprep.subr.mxu0 %v170
  %1107 = vmatpush2.msra.mxu0 %v169
  %1108 = vmatprep.subr.mxu0 %v168
  %1109 = vmatpush2.msra.mxu0 %v167
  %1110 = vmatprep.subr.mxu0 %v166
  %1111 = vmatpush2.msra.mxu0 %v165
  %1112 = vmatprep.subr.mxu0 %v164
  %1113 = vmatpush2.msra.mxu0 %v163
  %1114 = vmatprep.subr.mxu0 %v162
  %1115 = vmatpush2.msra.mxu0 %v161
  %1116 = vmatprep.subr.mxu0 %v160
  %1117 = vmatpush2.msra.mxu0 %v159
  %1118 = vmatprep.subr.mxu0 %v158
  %1119 = vmatpush2.msra.mxu0 %v157
  %1120 = vmatprep.subr.mxu0 %v156
  %1121 = vmatpush2.msra.mxu0 %v155
  %1122 = vmatprep.subr.mxu0 %v154
  %1123 = vmatpush2.msra.mxu0 %v153
  %1124 = vmatprep.subr.mxu0 %v152
  %1125 = vmatpush2.msra.mxu0 %v151
  %1126 = vmatprep.subr.mxu0 %v150
  %1127 = vmatpush2.msra.mxu0 %v149
  %1128 = vmatprep.subr.mxu0 %v148
  %1129 = vmatpush2.msra.mxu0 %v147
  %1130 = vmatprep.mubr.f32.mxu0 %v987
  %1131 = vmatmul.mubr.f32.gmra.mxu0 %v980
  %v1132 = vpop.f32.mrf.mxu0
  %v1133 = vadd.f32 %v1062, %v1132
  %v1134 = vpop.f32.mrf.mxu0
  %v1135 = vadd.f32 %v1064, %v1134
  %1136 = vdwg.mxu0
  %1137 = vmatprep.subr.mxu0 %v210
  %1138 = vmatpush1.msra.mxu0 %v209
  %1139 = vmatprep.subr.mxu0 %v208
  %1140 = vmatpush1.msra.mxu0 %v207
  %1141 = vmatprep.subr.mxu0 %v206
  %1142 = vmatpush1.msra.mxu0 %v205
  %1143 = vmatprep.subr.mxu0 %v204
  %1144 = vmatpush1.msra.mxu0 %v203
  %1145 = vmatprep.subr.mxu0 %v202
  %1146 = vmatpush1.msra.mxu0 %v201
  %1147 = vmatprep.subr.mxu0 %v200
  %1148 = vmatpush1.msra.mxu0 %v199
  %1149 = vmatprep.subr.mxu0 %v198
  %1150 = vmatpush1.msra.mxu0 %v197
  %1151 = vmatprep.subr.mxu0 %v196
  %1152 = vmatpush1.msra.mxu0 %v195
  %1153 = vmatprep.subr.mxu0 %v194
  %1154 = vmatpush1.msra.mxu0 %v193
  %1155 = vmatprep.subr.mxu0 %v192
  %1156 = vmatpush1.msra.mxu0 %v191
  %1157 = vmatprep.subr.mxu0 %v190
  %1158 = vmatpush1.msra.mxu0 %v189
  %1159 = vmatprep.subr.mxu0 %v188
  %1160 = vmatpush1.msra.mxu0 %v187
  %1161 = vmatprep.subr.mxu0 %v186
  %1162 = vmatpush1.msra.mxu0 %v185
  %1163 = vmatprep.subr.mxu0 %v184
  %1164 = vmatpush1.msra.mxu0 %v183
  %1165 = vmatprep.subr.mxu0 %v182
  %1166 = vmatpush1.msra.mxu0 %v181
  %1167 = vmatprep.subr.mxu0 %v180
  %1168 = vmatpush1.msra.mxu0 %v179
  %1169 = vmatprep.subr.mxu0 %v242
  %1170 = vmatpush2.msra.mxu0 %v241
  %1171 = vmatprep.subr.mxu0 %v240
  %1172 = vmatpush2.msra.mxu0 %v239
  %1173 = vmatprep.subr.mxu0 %v238
  %1174 = vmatpush2.msra.mxu0 %v237
  %1175 = vmatprep.subr.mxu0 %v236
  %1176 = vmatpush2.msra.mxu0 %v235
  %1177 = vmatprep.subr.mxu0 %v234
  %1178 = vmatpush2.msra.mxu0 %v233
  %1179 = vmatprep.subr.mxu0 %v232
  %1180 = vmatpush2.msra.mxu0 %v231
  %1181 = vmatprep.subr.mxu0 %v230
  %1182 = vmatpush2.msra.mxu0 %v229
  %1183 = vmatprep.subr.mxu0 %v228
  %1184 = vmatpush2.msra.mxu0 %v227
  %1185 = vmatprep.subr.mxu0 %v226
  %1186 = vmatpush2.msra.mxu0 %v225
  %1187 = vmatprep.subr.mxu0 %v224
  %1188 = vmatpush2.msra.mxu0 %v223
  %1189 = vmatprep.subr.mxu0 %v222
  %1190 = vmatpush2.msra.mxu0 %v221
  %1191 = vmatprep.subr.mxu0 %v220
  %1192 = vmatpush2.msra.mxu0 %v219
  %1193 = vmatprep.subr.mxu0 %v218
  %1194 = vmatpush2.msra.mxu0 %v217
  %1195 = vmatprep.subr.mxu0 %v216
  %1196 = vmatpush2.msra.mxu0 %v215
  %1197 = vmatprep.subr.mxu0 %v214
  %1198 = vmatpush2.msra.mxu0 %v213
  %1199 = vmatprep.subr.mxu0 %v212
  %1200 = vmatpush2.msra.mxu0 %v211
  %1201 = vmatprep.mubr.f32.mxu0 %v988
  %1202 = vmatmul.mubr.f32.gmra.mxu0 %v993
  %v1203 = vpop.f32.mrf.mxu0
  %v1204 = vadd.f32 %v1133, %v1203
  %v1205 = vpop.f32.mrf.mxu0
  %v1206 = vadd.f32 %v1135, %v1205
  %1207 = vdwg.mxu0
  %v1209 = vsel %vm29, %v1204, 0
  %v1212 = vsel %vm29, %v1206, 0
  %1214 = vmatprep.subr.mxu0 0.0
  %1215 = vmatpush1.msra.mxu0 0.0
  %1216 = vmatprep.subr.mxu0 0.0
  %1217 = vmatpush1.msra.mxu0 0.0
  %1218 = vmatprep.subr.mxu0 0.0
  %1219 = vmatpush1.msra.mxu0 0.0
  %1220 = vmatprep.subr.mxu0 0.0
  %1221 = vmatpush1.msra.mxu0 0.0
  %1222 = vmatprep.subr.mxu0 0.0
  %1223 = vmatpush1.msra.mxu0 0.0
  %1224 = vmatprep.subr.mxu0 0.0
  %1225 = vmatpush1.msra.mxu0 0.0
  %1226 = vmatprep.subr.mxu0 0.0
  %1227 = vmatpush1.msra.mxu0 0.0
  %1228 = vmatprep.subr.mxu0 0.0
  %1229 = vmatpush1.msra.mxu0 0.0
  %1230 = vmatprep.subr.mxu0 0.0
  %1231 = vmatpush1.msra.mxu0 0.0
  %1232 = vmatprep.subr.mxu0 0.0
  %1233 = vmatpush1.msra.mxu0 0.0
  %1234 = vmatprep.subr.mxu0 0.0
  %1235 = vmatpush1.msra.mxu0 0.0
  %1236 = vmatprep.subr.mxu0 0.0
  %1237 = vmatpush1.msra.mxu0 0.0
  %1238 = vmatprep.subr.mxu0 0.0
  %1239 = vmatpush1.msra.mxu0 0.0
  %1240 = vmatprep.subr.mxu0 0.0
  %1241 = vmatpush1.msra.mxu0 0.0
  %1242 = vmatprep.subr.mxu0 0.0
  %1243 = vmatpush1.msra.mxu0 0.0
  %1244 = vmatprep.subr.mxu0 %v1212
  %1245 = vmatpush1.msra.mxu0 %v1209
  %1246 = vmatprep.subr.mxu0 0.0
  %1247 = vmatpush2.msra.mxu0 0.0
  %1248 = vmatprep.subr.mxu0 0.0
  %1249 = vmatpush2.msra.mxu0 0.0
  %1250 = vmatprep.subr.mxu0 0.0
  %1251 = vmatpush2.msra.mxu0 0.0
  %1252 = vmatprep.subr.mxu0 0.0
  %1253 = vmatpush2.msra.mxu0 0.0
  %1254 = vmatprep.subr.mxu0 0.0
  %1255 = vmatpush2.msra.mxu0 0.0
  %1256 = vmatprep.subr.mxu0 0.0
  %1257 = vmatpush2.msra.mxu0 0.0
  %1258 = vmatprep.subr.mxu0 0.0
  %1259 = vmatpush2.msra.mxu0 0.0
  %1260 = vmatprep.subr.mxu0 0.0
  %1261 = vmatpush2.msra.mxu0 0.0
  %1262 = vmatprep.subr.mxu0 0.0
  %1263 = vmatpush2.msra.mxu0 0.0
  %1264 = vmatprep.subr.mxu0 0.0
  %1265 = vmatpush2.msra.mxu0 0.0
  %1266 = vmatprep.subr.mxu0 0.0
  %1267 = vmatpush2.msra.mxu0 0.0
  %1268 = vmatprep.subr.mxu0 0.0
  %1269 = vmatpush2.msra.mxu0 0.0
  %1270 = vmatprep.subr.mxu0 0.0
  %1271 = vmatpush2.msra.mxu0 0.0
  %1272 = vmatprep.subr.mxu0 0.0
  %1273 = vmatpush2.msra.mxu0 0.0
  %1274 = vmatprep.subr.mxu0 0.0
  %1275 = vmatpush2.msra.mxu0 0.0
  %1276 = vmatprep.subr.mxu0 0.0
  %1277 = vmatpush2.msra.mxu0 0.0
  %1278 = vmatprep.mubr.f32.mxu0 0.0
  %1279 = vmatmul.mubr.f32.gmra.mxu0 %v470
  %v1280 = vpop.f32.mrf.mxu0
  %v1281 = vadd.f32 %v464, %v1280
  %v1282 = vpop.f32.mrf.mxu0
  %v1283 = vadd.f32 %v466, %v1282
  %1284 = vdwg.mxu0
  %v1287 = vcombine.low %v1281, %v1283
  %1289 = vst [vmem:[%s5] sm:$0xff] %v1287
  // Predicated region
  $region22: #{forward.3} parent=0 // pred_check
    _
  $region23: #{forward.3} parent=0 // pred_check_branch
    %1291 = sbr.rel (0) target = $region25
  $region24: #{forward.3} parent=0 // pred_region
    _
  $region25: #{forward.3} parent=0 // pred_fallthru
    _
  // Predicated region
  $region26: #{forward.3} parent=0 // pred_check
    _
  $region27: #{forward.3} parent=0 // pred_check_branch
    %1293 = sbr.rel (0) target = $region29
  $region28: #{forward.3} parent=0 // pred_region
    _
  $region29: #{forward.3} parent=0 // pred_fallthru
    _

</llo_original>
